<compile_context>
chip_gen: v7x
topology: tpu7x:2x2x1
jax: 0.10.0
libtpu: 0.0.40
codegen_flags: <defaults>
</compile_context>

<pallas_src>
import warnings

import numpy as np
import jax
import jax.numpy as jnp
from jax import lax
from jax.experimental import pallas as pl
from jax.experimental.pallas import tpu as pltpu

_C = 1.0          # Poincare ball curvature
_EPS = 1e-15


# ----------------------------- Poincare ball glue (plain JAX) -----------------------------
def _artanh(x):
    x = jnp.clip(x, -1.0 + 1e-7, 1.0 - 1e-7)
    return 0.5 * (jnp.log1p(x) - jnp.log1p(-x))


def _norm(x):
    return jnp.maximum(jnp.linalg.norm(x, axis=-1, keepdims=True), _EPS)


def mobius_add(x, y, c=_C):
    x2 = jnp.sum(x * x, -1, keepdims=True)
    y2 = jnp.sum(y * y, -1, keepdims=True)
    xy = jnp.sum(x * y, -1, keepdims=True)
    num = (1.0 + 2.0 * c * xy + c * y2) * x + (1.0 - c * x2) * y
    den = 1.0 + 2.0 * c * xy + c * c * x2 * y2
    return num / jnp.maximum(den, _EPS)


def expmap0(u, c=_C):
    sc = jnp.sqrt(c)
    un = _norm(u)
    return jnp.tanh(sc * un) * u / (sc * un)


def logmap0(x, c=_C):
    sc = jnp.sqrt(c)
    xn = _norm(x)
    return _artanh(sc * xn) * x / (sc * xn)


def project(x, c=_C, eps=1e-5):
    xn = _norm(x)
    maxnorm = (1.0 - eps) / jnp.sqrt(c)
    return jnp.where(xn > maxnorm, x / xn * maxnorm, x)


def mobius_matvec(w, x, c=_C):  # w: (out, in) torch layout, x: (..., in)
    sc = jnp.sqrt(c)
    xn = _norm(x)
    mx = x @ w.T
    mxn = _norm(mx)
    return jnp.tanh(mxn / xn * _artanh(sc * xn)) * mx / (mxn * sc)


def poincare_linear(x, w, b, c=_C):
    mv = mobius_matvec(w, x, c)
    return project(mobius_add(mv, expmap0(b, c), c), c)


# ----------------------------- hardware / tiling helpers -----------------------------
def _tpu_generation():
    try:
        kind = jax.devices()[0].device_kind.lower()
    except Exception:
        return 6
    for g in (7, 6, 5, 4, 3):
        if (f"v{g}" in kind) or (f"{g}x" in kind) or (f"{g}e" in kind) or (f"{g}p" in kind):
            return g
    return 6


def _hw_config():
    gen = _tpu_generation()
    if gen >= 7:
        # v7x: 64 MiB VMEM per TensorCore -> smaller tiles, leave headroom for Mosaic.
        return dict(gen=gen, ti_cap=64, tj_cap=64, vmem_cap=48 * 2 ** 20)
    # v5e / v6e: 128 MiB VMEM, single TC -> larger ti halves step count / bj re-streaming.
    return dict(gen=gen, ti_cap=256 if gen >= 5 else 128, tj_cap=128, vmem_cap=96 * 2 ** 20)


def _round_up(x, m):
    return -(-x // m) * m


def _pick_ti(n_pad, cap):
    t = (min(cap, n_pad) // 8) * 8
    while t >= 8:
        if n_pad % t == 0:
            return t
        t -= 8
    return n_pad


def _pick_tj(n_pad, oc, cap):
    """Return (tj, lane_dense_ok): prefer tiles whose packed (tj*oc) width is 128-lane dense."""
    t = (min(cap, n_pad) // 8) * 8
    best_plain = None
    while t >= 8:
        if n_pad % t == 0:
            if (t * oc) % 128 == 0:
                return t, True
            if best_plain is None:
                best_plain = t
        t -= 8
    if n_pad <= max(2 * cap, 256):
        return n_pad, True      # full-dim block: always (8,128)-legal and lane-dense
    # TODO(synk): pathological (huge N, odd oc) -> plain (ti, tj, oc) layout.
    return (best_plain or 8), False


def _pick_chunk_rows(ti, tj, target_pairs=2048):
    """i-row chunk so each in-kernel sub-block covers ~target_pairs pairs (multiple of 8)."""
    chi = max(8, min(ti, (target_pairs // max(tj, 1)) // 8 * 8))
    while chi > 8 and ti % chi != 0:
        chi -= 8
    return chi if ti % chi == 0 else ti


# ----------------------------- Pallas kernel: pairwise edge MLP ---------------------------
def _make_edge_kernel(ti, tj, chi, oc, ew_dtype, lane_dense):
    """Pairwise edge MLP over one (ti, tj) tile of node pairs, chunked along the i rows."""
    n_chunks = ti // chi

    def kernel(ai_ref, bj_ref, w23_ref, b23_ref, w4_ref, b4_ref, out_ref):
        d = ai_ref.shape[2]
        w23 = w23_ref[...]                       # (D, D)   compute dtype
        b23 = b23_ref[...]                       # (1, D)   f32
        w4 = w4_ref[...]                         # (D, oc)  compute dtype
        b4 = b4_ref[...]                         # (1, oc)  f32
        bj = bj_ref[0].astype(ew_dtype)          # (tj, D)  hoisted zj @ W1b + b1 (loaded once)

        def chunk(c, carry):
            start = c * chi
            if not isinstance(start, int):
                start = pl.multiple_of(start, chi)
            ai_c = ai_ref[0, pl.ds(start, chi), :].astype(ew_dtype)        # (chi, D)

            # interaction layer 1 + ReLU, kept in the streamed dtype (no f32 round trip;
            # ew_dtype is f32 only on v5e, which lacks a bf16 VALU).
            h1 = jnp.maximum(ai_c[:, None, :] + bj[None, :, :], 0)         # (chi, tj, D)
            h1 = h1.reshape(chi * tj, d).astype(w23.dtype)                 # tile-preserving reshape

            # fused (interaction layer 2) @ (classifier layer 1) + ReLU   -- exact fusion
            e1 = jnp.maximum(
                jnp.dot(h1, w23, preferred_element_type=jnp.float32) + b23, 0.0
            ).astype(w4.dtype)                                             # (chi*tj, D)

            out = jnp.dot(e1, w4, preferred_element_type=jnp.float32) + b4  # (chi*tj, oc) f32

            if lane_dense:
                # one lane-dense slab store per chunk: (chi, tj*oc).  The (chi*tj, oc) ->
                # (chi, tj*oc) relayout is the remaining known XLU cost (review item 5).
                out_ref[0, pl.ds(start, chi), :] = out.reshape(chi, tj * oc).astype(out_ref.dtype)
            else:
                out_ref[0, pl.ds(start, chi), :, :] = out.reshape(chi, tj, oc).astype(out_ref.dtype)
            return carry

        if n_chunks == 1:
            chunk(0, None)
        else:
            lax.fori_loop(0, n_chunks, chunk, None, unroll=n_chunks <= 8)

    return kernel


# ----------------------------- wrapper -----------------------------
def pairwise_interaction_pallas(v, params, out_channels, *, compute_dtype=jnp.bfloat16,
                                out_dtype=jnp.float32, lane_dense_out=None, ti=None, tj=None):
    B, N, D = v.shape
    oc = out_channels
    hw = _hw_config()
    cdt = jnp.dtype(compute_dtype)
    odt = jnp.dtype(out_dtype)
    # v5e (and older) has no bf16 VALU: broadcast-add/ReLU in f32, matmul operands stay in cdt.
    ew_dtype = cdt if (hw["gen"] >= 6 or cdt == jnp.dtype(jnp.float32)) else jnp.dtype(jnp.float32)

    # Pad the node dim to a multiple of 8: (8,128)-legal blocks, even-ish grid extents for the
    # v7x megacore split; padded pairs are sliced off at the end.
    n_pad = max(8, _round_up(N, 8))

    # ---- wrapper-side prep: O(D^2) / O(B*N*D^2), negligible vs. the O(B*N^2*D^2) kernel ----
    w1 = params["w1"]                                      # torch Linear(2D, D) weight: (D, 2D)
    w1a = jnp.transpose(w1[:, :D])                         # (D, D) right-multiply form
    w1b = jnp.transpose(w1[:, D:])                         # (D, D)
    ai = (v @ w1a).astype(cdt)                             # hoisted i-side projection (B, N, D)
    bj = (v @ w1b + params["b1"]).astype(cdt)              # hoisted j-side projection + bias
    if n_pad != N:
        pad = [(0, 0), (0, n_pad - N), (0, 0)]
        ai = jnp.pad(ai, pad)
        bj = jnp.pad(bj, pad)
    w23 = (jnp.transpose(params["w2"]) @ jnp.transpose(params["w3"])).astype(cdt)   # (D, D)
    b23 = (params["b2"] @ jnp.transpose(params["w3"]) + params["b3"]).reshape(1, D)
    b23 = b23.astype(jnp.float32)
    w4t = jnp.transpose(params["w4"]).astype(cdt)          # (D, oc)
    b4 = params["b4"].reshape(1, oc).astype(jnp.float32)

    ti_ = _pick_ti(n_pad, hw["ti_cap"]) if ti is None else ti
    tj_auto, lane_ok = _pick_tj(n_pad, oc, hw["tj_cap"])
    tj_ = tj_auto if tj is None else tj
    assert n_pad % ti_ == 0 and n_pad % tj_ == 0
    assert ti_ % 8 == 0 and tj_ % 8 == 0, "tiles must be multiples of 8"

    def _run(lane_dense):
        chi = _pick_chunk_rows(ti_, tj_)
        grid = (B, n_pad // ti_, n_pad // tj_)             # j innermost: ai block stays resident

        def const_spec(shape):
            nd = len(shape)
            return pl.BlockSpec(shape, lambda *_: (0,) * nd)

        in_specs = [
            pl.BlockSpec((1, ti_, D), lambda b, i, j: (b, i, 0)),
            pl.BlockSpec((1, tj_, D), lambda b, i, j: (b, j, 0)),
            const_spec((D, D)), const_spec((1, D)),
            const_spec((D, oc)), const_spec((1, oc)),
        ]
        if lane_dense:
            out_shape = jax.ShapeDtypeStruct((B, n_pad, n_pad * oc), odt)
            out_specs = pl.BlockSpec((1, ti_, tj_ * oc), lambda b, i, j: (b, i, j))
        else:
            out_shape = jax.ShapeDtypeStruct((B, n_pad, n_pad, oc), odt)
            out_specs = pl.BlockSpec((1, ti_, tj_, oc), lambda b, i, j: (b, i, j, 0))

        # ---- (8,128)-lane-padding-aware VMEM budget (double-buffered blocks + chunk temps) ----
        lane = 128
        in_blk = 2 * (ti_ + tj_) * _round_up(D, lane) * cdt.itemsize
        if lane_dense:
            out_blk = 2 * ti_ * _round_up(tj_ * oc, lane) * odt.itemsize
        else:
            out_blk = 2 * ti_ * tj_ * _round_up(oc, lane) * odt.itemsize
        wgt_blk = 2 * (_round_up(D, 8) * (_round_up(D, lane) + _round_up(oc, lane)) * cdt.itemsize
                       + 2 * 8 * lane * 4)
        chunk_tmp = 5 * chi * tj_ * _round_up(D, lane) * 4   # h1/e1/out/casts, f32-equivalent
        needed = in_blk + out_blk + wgt_blk + chunk_tmp
        vmem_limit = int(min(hw["vmem_cap"], max(32 * 2 ** 20, int(needed * 1.5))))

        flops = 2 * B * n_pad * n_pad * (D * D + D * oc)
        bytes_accessed = (B * n_pad * n_pad * oc * odt.itemsize
                          + (1 + n_pad // ti_) * B * n_pad * D * cdt.itemsize)
        cost = pl.CostEstimate(flops=flops, transcendentals=0, bytes_accessed=bytes_accessed)

        out = pl.pallas_call(
            _make_edge_kernel(ti_, tj_, chi, oc, ew_dtype, lane_dense),
            out_shape=out_shape,
            grid_spec=pltpu.PrefetchScalarGridSpec(
                num_scalar_prefetch=0, grid=grid,
                in_specs=in_specs, out_specs=out_specs),
            compiler_params=pltpu.CompilerParams(
                dimension_semantics=("parallel", "parallel", "parallel"),
                vmem_limit_bytes=vmem_limit),
            cost_estimate=cost,
        )(ai, bj, w23, b23, w4t, b4)

        if lane_dense:
            out = out.reshape(B, n_pad, n_pad, oc)
        return out[:, :N, :N, :] if n_pad != N else out

    if lane_dense_out is None:
        if not lane_ok:
            return _run(False)
        try:
            return _run(True)
        except Exception as e:   # explicit, logged layout fallback (review item 6)
            warnings.warn(
                "lane-dense (ti, tj*oc) output relayout did not lower on this toolchain "
                f"({type(e).__name__}); falling back to plain (ti, tj, oc) output blocks.")
            return _run(False)
    return _run(bool(lane_dense_out))


# ----------------------------- full module forward -----------------------------
def hyp2edge_decoder_forward(z, params, out_channels, *, compute_dtype=jnp.bfloat16,
                             out_dtype=jnp.float32, lane_dense_out=None, ti=None, tj=None):
    # PoincareMLP decoder: two PoincareLinear layers (dropout=0, no resnet/layernorm, no act).
    # Front-end is O(B*N*D^2) and stays in plain JAX (negligible vs. the O(B*N^2*D^2) kernel).
    h = poincare_linear(z, params["dec_w1"], params["dec_b1"])
    h = poincare_linear(h, params["dec_w2"], params["dec_b2"])
    v = logmap0(h)                                          # (B, N, euc_channels)
    return pairwise_interaction_pallas(v, params, out_channels, ti=ti, tj=tj,
                                       compute_dtype=compute_dtype, out_dtype=out_dtype,
                                       lane_dense_out=lane_dense_out)


def reference_forward(z, params, out_channels):
    h = poincare_linear(z, params["dec_w1"], params["dec_b1"])
    h = poincare_linear(h, params["dec_w2"], params["dec_b2"])
    v = logmap0(h)
    B, N, D = v.shape
    zi = jnp.broadcast_to(v[:, :, None, :], (B, N, N, D))
    zj = jnp.broadcast_to(v[:, None, :, :], (B, N, N, D))
    pair = jnp.concatenate([zi, zj], axis=-1)
    h1 = jax.nn.relu(pair @ params["w1"].T + params["b1"])
    h2 = h1 @ params["w2"].T + params["b2"]
    e1 = jax.nn.relu(h2 @ params["w3"].T + params["b3"])
    return e1 @ params["w4"].T + params["b4"]


# ----------------------------- deterministic parameter init -----------------------------
def _linear_init(key, fan_in, fan_out):
    kw, kb = jax.random.split(key)
    bound = 1.0 / np.sqrt(fan_in)
    w = jax.random.uniform(kw, (fan_out, fan_in), jnp.float32, -bound, bound)
    b = jax.random.uniform(kb, (fan_out,), jnp.float32, -bound, bound)
    return w, b


def make_params(key, in_channels, euc_channels, out_channels):
    keys = jax.random.split(key, 6)
    p = {}
    p["dec_w1"], p["dec_b1"] = _linear_init(keys[0], in_channels, euc_channels)
    p["dec_w2"], p["dec_b2"] = _linear_init(keys[1], euc_channels, euc_channels)
    p["w1"], p["b1"] = _linear_init(keys[2], 2 * euc_channels, euc_channels)   # interaction_mlp[0]
    p["w2"], p["b2"] = _linear_init(keys[3], euc_channels, euc_channels)       # interaction_mlp[2]
    p["w3"], p["b3"] = _linear_init(keys[4], euc_channels, euc_channels)       # edge_classifier[0]
    p["w4"], p["b4"] = _linear_init(keys[5], euc_channels, out_channels)       # edge_classifier[2]
    return p


if __name__ == "__main__":
    B, N = 2, 8
    in_channels, euc_channels, out_channels = 32, 32, 4

    root = jax.random.PRNGKey(0)
    k_params, k_z = jax.random.split(root)
    params = make_params(k_params, in_channels, euc_channels, out_channels)

    # Valid points on the Poincare ball: expmap0 of small tangent vectors.
    tangent = 0.1 * jax.random.normal(k_z, (B, N, in_channels), jnp.float32)
    z = project(expmap0(tangent))

    # ---- strict numeric gate: f32 streams, matmul precision scoped (not a global setting) ----
    with jax.default_matmul_precision("highest"):
        ref = np.asarray(jax.block_until_ready(reference_forward(z, params, out_channels)))
        out_f32 = np.asarray(jax.block_until_ready(
            hyp2edge_decoder_forward(z, params, out_channels,
                                     compute_dtype=jnp.float32, out_dtype=jnp.float32)))
    assert out_f32.shape == (B, N, N, out_channels), out_f32.shape
    np.testing.assert_allclose(out_f32, ref, rtol=1e-3, atol=1e-3)

    # ---- production fast path: bf16 streams + bf16 intermediates (f32 elementwise on v5e),
    #      bf16 output to halve the dominant HBM write stream ----
    out_bf16 = np.asarray(jax.block_until_ready(
        hyp2edge_decoder_forward(z, params, out_channels,
                                 compute_dtype=jnp.bfloat16,
                                 out_dtype=jnp.bfloat16))).astype(np.float32)
    np.testing.assert_allclose(out_bf16, ref, rtol=1e-1, atol=5e-2)

    print("KERNEL_OK")
</pallas_src>

<mosaic_0001>
module attributes {stable_mosaic.version = 11 : i64} {
  func.func @kernel(%arg0: i32, %arg1: i32, %arg2: i32, %arg3: memref<1x8x32xf32, #tpu.memory_space<vmem>>, %arg4: memref<1x8x32xf32, #tpu.memory_space<vmem>>, %arg5: memref<32x32xf32, #tpu.memory_space<vmem>>, %arg6: memref<1x32xf32, #tpu.memory_space<vmem>>, %arg7: memref<32x4xf32, #tpu.memory_space<vmem>>, %arg8: memref<1x4xf32, #tpu.memory_space<vmem>>, %arg9: memref<1x8x32xf32, #tpu.memory_space<vmem>>) attributes {dimension_semantics = [#tpu.dimension_semantics<parallel>, #tpu.dimension_semantics<parallel>, #tpu.dimension_semantics<parallel>], iteration_bounds = array<i64: 2, 1, 1>, scalar_prefetch = 0 : i64, scratch_operands = 0 : i64, tpu.core_type = #tpu.core_type<tc>, window_params = [{transform_indices = @transform_0, window_bounds = array<i64: 1, 8, 32>}, {transform_indices = @transform_1, window_bounds = array<i64: 1, 8, 32>}, {pipeline_mode = #tpu.pipeline_mode<synchronous>, transform_indices = @transform_2, window_bounds = array<i64: 32, 32>}, {pipeline_mode = #tpu.pipeline_mode<synchronous>, transform_indices = @transform_3, window_bounds = array<i64: 1, 32>}, {pipeline_mode = #tpu.pipeline_mode<synchronous>, transform_indices = @transform_4, window_bounds = array<i64: 32, 4>}, {pipeline_mode = #tpu.pipeline_mode<synchronous>, transform_indices = @transform_5, window_bounds = array<i64: 1, 4>}, {transform_indices = @transform_6, window_bounds = array<i64: 1, 8, 32>}]} {
    %c0 = arith.constant 0 : index
    %c0_0 = arith.constant 0 : index
    %0 = vector.load %arg5[%c0, %c0_0] : memref<32x32xf32, #tpu.memory_space<vmem>>, vector<32x32xf32>
    %c0_1 = arith.constant 0 : index
    %c0_2 = arith.constant 0 : index
    %1 = vector.load %arg6[%c0_1, %c0_2] : memref<1x32xf32, #tpu.memory_space<vmem>>, vector<1x32xf32>
    %c0_3 = arith.constant 0 : index
    %c0_4 = arith.constant 0 : index
    %2 = vector.load %arg7[%c0_3, %c0_4] : memref<32x4xf32, #tpu.memory_space<vmem>>, vector<32x4xf32>
    %c0_5 = arith.constant 0 : index
    %c0_6 = arith.constant 0 : index
    %3 = vector.load %arg8[%c0_5, %c0_6] : memref<1x4xf32, #tpu.memory_space<vmem>>, vector<1x4xf32>
    %c0_7 = arith.constant 0 : index
    %c0_8 = arith.constant 0 : index
    %c0_9 = arith.constant 0 : index
    %4 = vector.load %arg4[%c0_7, %c0_8, %c0_9] : memref<1x8x32xf32, #tpu.memory_space<vmem>>, vector<1x8x32xf32>
    %5 = vector.shape_cast %4 : vector<1x8x32xf32> to vector<8x32xf32>
    %c0_10 = arith.constant 0 : index
    %c0_11 = arith.constant 0 : index
    %c0_12 = arith.constant 0 : index
    %6 = vector.load %arg3[%c0_10, %c0_11, %c0_12] : memref<1x8x32xf32, #tpu.memory_space<vmem>>, vector<1x8x32xf32>
    %7 = vector.shape_cast %6 : vector<1x8x32xf32> to vector<8x32xf32>
    %8 = vector.shape_cast %7 : vector<8x32xf32> to vector<8x1x32xf32>
    %9 = vector.shape_cast %5 : vector<8x32xf32> to vector<1x8x32xf32>
    %10 = vector.broadcast %8 : vector<8x1x32xf32> to vector<8x8x32xf32>
    %11 = vector.broadcast %9 : vector<1x8x32xf32> to vector<8x8x32xf32>
    %12 = arith.addf %10, %11 : vector<8x8x32xf32>
    %cst = arith.constant 0.000000e+00 : f32
    %13 = vector.broadcast %cst : f32 to vector<8x8x32xf32>
    %14 = arith.maximumf %12, %13 : vector<8x8x32xf32>
    %15 = vector.shape_cast %14 : vector<8x8x32xf32> to vector<64x32xf32>
    %cst_13 = arith.constant dense<0.000000e+00> : vector<64x32xf32>
    %16 = tpu.matmul %15, %0, %cst_13 {dimension_numbers = #tpu.dot_dimension_numbers<[1], [0], [0], [1], [0, 0, 1, 1], [], []>, precision = #tpu.contract_precision<fp32>} : vector<64x32xf32>, vector<32x32xf32>, vector<64x32xf32> -> vector<64x32xf32>
    %17 = vector.broadcast %1 : vector<1x32xf32> to vector<64x32xf32>
    %18 = arith.addf %16, %17 : vector<64x32xf32>
    %cst_14 = arith.constant 0.000000e+00 : f32
    %19 = vector.broadcast %cst_14 : f32 to vector<64x32xf32>
    %20 = arith.maximumf %18, %19 : vector<64x32xf32>
    %cst_15 = arith.constant dense<0.000000e+00> : vector<64x4xf32>
    %21 = tpu.matmul %20, %2, %cst_15 {dimension_numbers = #tpu.dot_dimension_numbers<[1], [0], [0], [1], [0, 0, 1, 1], [], []>, precision = #tpu.contract_precision<fp32>} : vector<64x32xf32>, vector<32x4xf32>, vector<64x4xf32> -> vector<64x4xf32>
    %22 = vector.broadcast %3 : vector<1x4xf32> to vector<64x4xf32>
    %23 = arith.addf %21, %22 : vector<64x4xf32>
    %24 = vector.shape_cast %23 : vector<64x4xf32> to vector<8x32xf32>
    %c0_16 = arith.constant 0 : index
    %c0_17 = arith.constant 0 : index
    %c0_18 = arith.constant 0 : index
    %25 = vector.load %arg9[%c0_16, %c0_17, %c0_18] : memref<1x8x32xf32, #tpu.memory_space<vmem>>, vector<1x8x32xf32>
    %26 = vector.shape_cast %25 : vector<1x8x32xf32> to vector<8x32xf32>
    %27 = vector.shape_cast %24 : vector<8x32xf32> to vector<1x8x32xf32>
    tpu.vector_store %arg9[%c0_16, %c0_17, %c0_18], %27 {strides = array<i32>} : memref<1x8x32xf32, #tpu.memory_space<vmem>>, vector<1x8x32xf32>,
    return
  }
  func.func @transform_0(%arg0: i32, %arg1: i32, %arg2: i32) -> (i32, i32, i32) {
    %c0_i32 = arith.constant 0 : i32
    %c0_i32_0 = arith.constant 0 : i32
    return %arg0, %arg1, %c0_i32 : i32, i32, i32
  }
  func.func @transform_1(%arg0: i32, %arg1: i32, %arg2: i32) -> (i32, i32, i32) {
    %c0_i32 = arith.constant 0 : i32
    %c0_i32_0 = arith.constant 0 : i32
    return %arg0, %arg2, %c0_i32 : i32, i32, i32
  }
  func.func @transform_2(%arg0: i32, %arg1: i32, %arg2: i32) -> (i32, i32) {
    %c0_i32 = arith.constant 0 : i32
    %c0_i32_0 = arith.constant 0 : i32
    %c0_i32_1 = arith.constant 0 : i32
    return %c0_i32, %c0_i32_0 : i32, i32
  }
  func.func @transform_3(%arg0: i32, %arg1: i32, %arg2: i32) -> (i32, i32) {
    %c0_i32 = arith.constant 0 : i32
    %c0_i32_0 = arith.constant 0 : i32
    %c0_i32_1 = arith.constant 0 : i32
    return %c0_i32, %c0_i32_0 : i32, i32
  }
  func.func @transform_4(%arg0: i32, %arg1: i32, %arg2: i32) -> (i32, i32) {
    %c0_i32 = arith.constant 0 : i32
    %c0_i32_0 = arith.constant 0 : i32
    %c0_i32_1 = arith.constant 0 : i32
    return %c0_i32, %c0_i32_0 : i32, i32
  }
  func.func @transform_5(%arg0: i32, %arg1: i32, %arg2: i32) -> (i32, i32) {
    %c0_i32 = arith.constant 0 : i32
    %c0_i32_0 = arith.constant 0 : i32
    %c0_i32_1 = arith.constant 0 : i32
    return %c0_i32, %c0_i32_0 : i32, i32
  }
  func.func @transform_6(%arg0: i32, %arg1: i32, %arg2: i32) -> (i32, i32, i32) {
    %c0_i32 = arith.constant 0 : i32
    return %arg0, %arg1, %arg2 : i32, i32, i32
  }
}

module attributes {stable_mosaic.version = 11 : i64} {
  func.func @kernel(%arg0: i32, %arg1: i32, %arg2: i32, %arg3: memref<1x8x32xf32, #tpu.memory_space<vmem>>, %arg4: memref<1x8x32xf32, #tpu.memory_space<vmem>>, %arg5: memref<32x32xf32, #tpu.memory_space<vmem>>, %arg6: memref<1x32xf32, #tpu.memory_space<vmem>>, %arg7: memref<32x4xf32, #tpu.memory_space<vmem>>, %arg8: memref<1x4xf32, #tpu.memory_space<vmem>>, %arg9: memref<1x8x8x4xf32, #tpu.memory_space<vmem>>) attributes {dimension_semantics = [#tpu.dimension_semantics<parallel>, #tpu.dimension_semantics<parallel>, #tpu.dimension_semantics<parallel>], iteration_bounds = array<i64: 2, 1, 1>, scalar_prefetch = 0 : i64, scratch_operands = 0 : i64, tpu.core_type = #tpu.core_type<tc>, window_params = [{transform_indices = @transform_0, window_bounds = array<i64: 1, 8, 32>}, {transform_indices = @transform_1, window_bounds = array<i64: 1, 8, 32>}, {pipeline_mode = #tpu.pipeline_mode<synchronous>, transform_indices = @transform_2, window_bounds = array<i64: 32, 32>}, {pipeline_mode = #tpu.pipeline_mode<synchronous>, transform_indices = @transform_3, window_bounds = array<i64: 1, 32>}, {pipeline_mode = #tpu.pipeline_mode<synchronous>, transform_indices = @transform_4, window_bounds = array<i64: 32, 4>}, {pipeline_mode = #tpu.pipeline_mode<synchronous>, transform_indices = @transform_5, window_bounds = array<i64: 1, 4>}, {transform_indices = @transform_6, window_bounds = array<i64: 1, 8, 8, 4>}]} {
    %c0 = arith.constant 0 : index
    %c0_0 = arith.constant 0 : index
    %0 = vector.load %arg5[%c0, %c0_0] : memref<32x32xf32, #tpu.memory_space<vmem>>, vector<32x32xf32>
    %c0_1 = arith.constant 0 : index
    %c0_2 = arith.constant 0 : index
    %1 = vector.load %arg6[%c0_1, %c0_2] : memref<1x32xf32, #tpu.memory_space<vmem>>, vector<1x32xf32>
    %c0_3 = arith.constant 0 : index
    %c0_4 = arith.constant 0 : index
    %2 = vector.load %arg7[%c0_3, %c0_4] : memref<32x4xf32, #tpu.memory_space<vmem>>, vector<32x4xf32>
    %c0_5 = arith.constant 0 : index
    %c0_6 = arith.constant 0 : index
    %3 = vector.load %arg8[%c0_5, %c0_6] : memref<1x4xf32, #tpu.memory_space<vmem>>, vector<1x4xf32>
    %c0_7 = arith.constant 0 : index
    %c0_8 = arith.constant 0 : index
    %c0_9 = arith.constant 0 : index
    %4 = vector.load %arg4[%c0_7, %c0_8, %c0_9] : memref<1x8x32xf32, #tpu.memory_space<vmem>>, vector<1x8x32xf32>
    %5 = vector.shape_cast %4 : vector<1x8x32xf32> to vector<8x32xf32>
    %c0_10 = arith.constant 0 : index
    %c0_11 = arith.constant 0 : index
    %c0_12 = arith.constant 0 : index
    %6 = vector.load %arg3[%c0_10, %c0_11, %c0_12] : memref<1x8x32xf32, #tpu.memory_space<vmem>>, vector<1x8x32xf32>
    %7 = vector.shape_cast %6 : vector<1x8x32xf32> to vector<8x32xf32>
    %8 = vector.shape_cast %7 : vector<8x32xf32> to vector<8x1x32xf32>
    %9 = vector.shape_cast %5 : vector<8x32xf32> to vector<1x8x32xf32>
    %10 = vector.broadcast %8 : vector<8x1x32xf32> to vector<8x8x32xf32>
    %11 = vector.broadcast %9 : vector<1x8x32xf32> to vector<8x8x32xf32>
    %12 = arith.addf %10, %11 : vector<8x8x32xf32>
    %cst = arith.constant 0.000000e+00 : f32
    %13 = vector.broadcast %cst : f32 to vector<8x8x32xf32>
    %14 = arith.maximumf %12, %13 : vector<8x8x32xf32>
    %15 = vector.shape_cast %14 : vector<8x8x32xf32> to vector<64x32xf32>
    %cst_13 = arith.constant dense<0.000000e+00> : vector<64x32xf32>
    %16 = tpu.matmul %15, %0, %cst_13 {dimension_numbers = #tpu.dot_dimension_numbers<[1], [0], [0], [1], [0, 0, 1, 1], [], []>, precision = #tpu.contract_precision<fp32>} : vector<64x32xf32>, vector<32x32xf32>, vector<64x32xf32> -> vector<64x32xf32>
    %17 = vector.broadcast %1 : vector<1x32xf32> to vector<64x32xf32>
    %18 = arith.addf %16, %17 : vector<64x32xf32>
    %cst_14 = arith.constant 0.000000e+00 : f32
    %19 = vector.broadcast %cst_14 : f32 to vector<64x32xf32>
    %20 = arith.maximumf %18, %19 : vector<64x32xf32>
    %cst_15 = arith.constant dense<0.000000e+00> : vector<64x4xf32>
    %21 = tpu.matmul %20, %2, %cst_15 {dimension_numbers = #tpu.dot_dimension_numbers<[1], [0], [0], [1], [0, 0, 1, 1], [], []>, precision = #tpu.contract_precision<fp32>} : vector<64x32xf32>, vector<32x4xf32>, vector<64x4xf32> -> vector<64x4xf32>
    %22 = vector.broadcast %3 : vector<1x4xf32> to vector<64x4xf32>
    %23 = arith.addf %21, %22 : vector<64x4xf32>
    %24 = vector.shape_cast %23 : vector<64x4xf32> to vector<8x8x4xf32>
    %c0_16 = arith.constant 0 : index
    %c0_17 = arith.constant 0 : index
    %c0_18 = arith.constant 0 : index
    %c0_19 = arith.constant 0 : index
    %25 = vector.load %arg9[%c0_16, %c0_17, %c0_18, %c0_19] : memref<1x8x8x4xf32, #tpu.memory_space<vmem>>, vector<1x8x8x4xf32>
    %26 = vector.shape_cast %25 : vector<1x8x8x4xf32> to vector<8x8x4xf32>
    %27 = vector.shape_cast %24 : vector<8x8x4xf32> to vector<1x8x8x4xf32>
    tpu.vector_store %arg9[%c0_16, %c0_17, %c0_18, %c0_19], %27 {strides = array<i32>} : memref<1x8x8x4xf32, #tpu.memory_space<vmem>>, vector<1x8x8x4xf32>,
    return
  }
  func.func @transform_0(%arg0: i32, %arg1: i32, %arg2: i32) -> (i32, i32, i32) {
    %c0_i32 = arith.constant 0 : i32
    %c0_i32_0 = arith.constant 0 : i32
    return %arg0, %arg1, %c0_i32 : i32, i32, i32
  }
  func.func @transform_1(%arg0: i32, %arg1: i32, %arg2: i32) -> (i32, i32, i32) {
    %c0_i32 = arith.constant 0 : i32
    %c0_i32_0 = arith.constant 0 : i32
    return %arg0, %arg2, %c0_i32 : i32, i32, i32
  }
  func.func @transform_2(%arg0: i32, %arg1: i32, %arg2: i32) -> (i32, i32) {
    %c0_i32 = arith.constant 0 : i32
    %c0_i32_0 = arith.constant 0 : i32
    %c0_i32_1 = arith.constant 0 : i32
    return %c0_i32, %c0_i32_0 : i32, i32
  }
  func.func @transform_3(%arg0: i32, %arg1: i32, %arg2: i32) -> (i32, i32) {
    %c0_i32 = arith.constant 0 : i32
    %c0_i32_0 = arith.constant 0 : i32
    %c0_i32_1 = arith.constant 0 : i32
    return %c0_i32, %c0_i32_0 : i32, i32
  }
  func.func @transform_4(%arg0: i32, %arg1: i32, %arg2: i32) -> (i32, i32) {
    %c0_i32 = arith.constant 0 : i32
    %c0_i32_0 = arith.constant 0 : i32
    %c0_i32_1 = arith.constant 0 : i32
    return %c0_i32, %c0_i32_0 : i32, i32
  }
  func.func @transform_5(%arg0: i32, %arg1: i32, %arg2: i32) -> (i32, i32) {
    %c0_i32 = arith.constant 0 : i32
    %c0_i32_0 = arith.constant 0 : i32
    %c0_i32_1 = arith.constant 0 : i32
    return %c0_i32, %c0_i32_0 : i32, i32
  }
  func.func @transform_6(%arg0: i32, %arg1: i32, %arg2: i32) -> (i32, i32, i32, i32) {
    %c0_i32 = arith.constant 0 : i32
    %c0_i32_0 = arith.constant 0 : i32
    return %arg0, %arg1, %arg2, %c0_i32 : i32, i32, i32, i32
  }
}

</mosaic_0001>

<llo_original>
// kernel: tpu_custom_call.1
$region0: #{tpu_custom_call.1}
  #allocation0 [shape = 'u32[]', space=smem, size = 0x4, offset = 0x4, fixed_abs, tag = 'smem constant byte address 0x4 - core index']
  #allocation1 [shape = 'u32[144,128]{1,0:T(1,128)}', space=vmem, size = 0x12000, scoped, tag = 'internal scratch']
  %s0 = inlined_call_operand.hbm [shape: f32[2,8,32], index: 0, kind: input, shape index: {}]
  %s1 = inlined_call_operand.hbm [shape: f32[2,8,32], index: 1, kind: input, shape index: {}]
  %s2 = inlined_call_operand.vmem [shape: f32[32,32], index: 2, kind: input, shape index: {}]
  %s3 = inlined_call_operand.vmem [shape: f32[1,32], index: 3, kind: input, shape index: {}]
  %s4 = inlined_call_operand.vmem [shape: f32[32,4], index: 4, kind: input, shape index: {}]
  %s5 = inlined_call_operand.vmem [shape: f32[1,4], index: 5, kind: input, shape index: {}]
  %s6 = inlined_call_operand.vmem [shape: f32[2,8,8,4], index: 6, kind: output, shape index: {}]
  %s7 = sld [smem:[#allocation0]]
  $region65: #{tpu_custom_call.1} parent=0
    _
  %s9 = ssub.s32 1, %s7
  %s10 = scalar_select 0, %s9, %s7
  $region1: #{tpu_custom_call.1} parent=0
    #allocation2 [shape = 'u8[8192]{0}', space=vmem, size = 0x2000, scoped, tag = 'input window, operand 0']
    #allocation3 [shape = 's32[2]{0}', space=sflag, size = 0x8, scoped, tag = 'scoped memory for tpu_custom_call.1']
    #allocation4 [shape = 'u8[8192]{0}', space=vmem, size = 0x2000, scoped, tag = 'input window, operand 1']
    #allocation5 [shape = 's32[2]{0}', space=sflag, size = 0x8, scoped, tag = 'scoped memory for tpu_custom_call.1']
    %11 = vsyncpa [#allocation3], 0
    %s12 = scalar_lea.sflag [#allocation3], 1
    %13 = vsyncpa %s12, 0
    %14 = vsyncpa [#allocation5], 0
    %s15 = scalar_lea.sflag [#allocation5], 1
    %16 = vsyncpa %s15, 0
    loop: start=0, step=1, limit=4
    $region2: #{tpu_custom_call.1} parent=1 // loop_pre_header
      _
    $region3: #{tpu_custom_call.1} parent=1 // loop_header
      %s18 = sphi 0, %s22
      %p19 = scmp.ge.s32.totalorder %s18, 4
      %s25 = sphi 0, %s44
      %s26 = sphi 0, %s40
      %s27 = sphi 0, %s36
      %s28 = sphi 0, %s25
      %s29 = sphi 0, %s26
      %s30 = sphi 0, %s27
      %s31 = sphi 0, %s28
      %s32 = sphi 0, %s29
      %s33 = sphi 0, %s30
      %s49 = sphi 0, %s51
      %s52 = sphi 0, %s49
      %s53 = sphi 0, %s52
      %s69 = sphi 0, %s53
      %s77 = sphi 0, %s79
      %s80 = sphi 0, %s77
      %s81 = sphi 0, %s80
      %s97 = sphi 0, %s81
      %s101 = sphi 0, %s101
      %s103 = sphi 0, %s101
      %s104 = sphi 0, %s103
      %s118 = sphi 0, %s104
      %s122 = sphi 0, %s122
      %s124 = sphi 0, %s122
      %s125 = sphi 0, %s124
      %s139 = sphi 0, %s125
      %s143 = sphi 0, %s143
      %s145 = sphi 0, %s143
      %s146 = sphi 0, %s145
      %s160 = sphi 0, %s146
      %s164 = sphi 0, %s164
      %s166 = sphi 0, %s164
      %s167 = sphi 0, %s166
      %s181 = sphi 0, %s167
      %s191 = sphi 0, %s193
      %s194 = sphi 0, %s191
      %s195 = sphi 0, %s194
      %s211 = sphi 0, %s195
    $region4: #{tpu_custom_call.1} parent=1 // loop_header_branch
      %21 = sbr.rel (%p19) target = $region8
    $region5: #{tpu_custom_call.1} parent=1 // loop_body
      %s23 = ssub.s32 %s18, 1
      %s24 = ssub.s32 %s18, 2
      %s34 = sadd.s32 1, %s27
      %p35 = scmp.ge.s32.totalorder %s34, 1
      %s36 = scalar_select %p35, 0, %s34
      %s37 = sadd.s32 1, %s26
      %s38 = scalar_select %p35, %s37, %s26
      %p39 = scmp.ge.s32.totalorder %s38, 1
      %s40 = scalar_select %p39, 0, %s38
      %s41 = sadd.s32 1, %s25
      %s42 = scalar_select %p39, %s41, %s25
      %p43 = scmp.ge.s32.totalorder %s42, 2
      %s44 = scalar_select %p43, 0, %s42
      %s45 = ssub.s32 %s25, %s44
      %s46 = ssub.s32 %s26, %s40
      %s47 = sor.u32 %s45, %s46
      %p48 = scmp.eq.s32.totalorder %s47, 0
      %s50 = sadd.s32 %s49, 1
      %s51 = scalar_select %p48, %s49, %s50
      %p54 = pneg %p48
      %p55 = scmp.eq.s32.totalorder %s18, 1
      %p56 = por %p54, %p55
      %p57 = scmp.ne.s32.totalorder %s49, %s52
      %p58 = scmp.eq.s32.totalorder %s18, 0
      %p59 = por %p57, %p58
      %p60 = scmp.ne.s32.totalorder %s49, %s52
      %p61 = scmp.eq.s32.totalorder %s23, 1
      %p62 = por %p60, %p61
      %p63 = scmp.ne.s32.totalorder %s52, %s53
      %p64 = scmp.eq.s32.totalorder %s23, 0
      %p65 = por %p63, %p64
      %p66 = scmp.ne.s32.totalorder %s52, %s53
      %p67 = scmp.eq.s32.totalorder %s24, 1
      %p68 = por %p66, %p67
      %p70 = scmp.ne.s32.totalorder %s53, %s69
      %p71 = scmp.eq.s32.totalorder %s24, 0
      %p72 = por %p70, %p71
      %s73 = ssub.s32 %s25, %s44
      %s74 = ssub.s32 %s27, %s36
      %s75 = sor.u32 %s73, %s74
      %p76 = scmp.eq.s32.totalorder %s75, 0
      %s78 = sadd.s32 %s77, 1
      %s79 = scalar_select %p76, %s77, %s78
      %p82 = pneg %p76
      %p83 = scmp.eq.s32.totalorder %s18, 1
      %p84 = por %p82, %p83
      %p85 = scmp.ne.s32.totalorder %s77, %s80
      %p86 = scmp.eq.s32.totalorder %s18, 0
      %p87 = por %p85, %p86
      %p88 = scmp.ne.s32.totalorder %s77, %s80
      %p89 = scmp.eq.s32.totalorder %s23, 1
      %p90 = por %p88, %p89
      %p91 = scmp.ne.s32.totalorder %s80, %s81
      %p92 = scmp.eq.s32.totalorder %s23, 0
      %p93 = por %p91, %p92
      %p94 = scmp.ne.s32.totalorder %s80, %s81
      %p95 = scmp.eq.s32.totalorder %s24, 1
      %p96 = por %p94, %p95
      %p98 = scmp.ne.s32.totalorder %s81, %s97
      %p99 = scmp.eq.s32.totalorder %s24, 0
      %p100 = por %p98, %p99
      %s102 = sadd.s32 %s101, 1
      %p105 = scmp.eq.s32.totalorder %s18, 1
      %p106 = scmp.ne.s32.totalorder %s101, %s103
      %p107 = scmp.eq.s32.totalorder %s18, 0
      %p108 = por %p106, %p107
      %p109 = scmp.ne.s32.totalorder %s101, %s103
      %p110 = scmp.eq.s32.totalorder %s23, 1
      %p111 = por %p109, %p110
      %p112 = scmp.ne.s32.totalorder %s103, %s104
      %p113 = scmp.eq.s32.totalorder %s23, 0
      %p114 = por %p112, %p113
      %p115 = scmp.ne.s32.totalorder %s103, %s104
      %p116 = scmp.eq.s32.totalorder %s24, 1
      %p117 = por %p115, %p116
      %p119 = scmp.ne.s32.totalorder %s104, %s118
      %p120 = scmp.eq.s32.totalorder %s24, 0
      %p121 = por %p119, %p120
      %s123 = sadd.s32 %s122, 1
      %p126 = scmp.eq.s32.totalorder %s18, 1
      %p127 = scmp.ne.s32.totalorder %s122, %s124
      %p128 = scmp.eq.s32.totalorder %s18, 0
      %p129 = por %p127, %p128
      %p130 = scmp.ne.s32.totalorder %s122, %s124
      %p131 = scmp.eq.s32.totalorder %s23, 1
      %p132 = por %p130, %p131
      %p133 = scmp.ne.s32.totalorder %s124, %s125
      %p134 = scmp.eq.s32.totalorder %s23, 0
      %p135 = por %p133, %p134
      %p136 = scmp.ne.s32.totalorder %s124, %s125
      %p137 = scmp.eq.s32.totalorder %s24, 1
      %p138 = por %p136, %p137
      %p140 = scmp.ne.s32.totalorder %s125, %s139
      %p141 = scmp.eq.s32.totalorder %s24, 0
      %p142 = por %p140, %p141
      %s144 = sadd.s32 %s143, 1
      %p147 = scmp.eq.s32.totalorder %s18, 1
      %p148 = scmp.ne.s32.totalorder %s143, %s145
      %p149 = scmp.eq.s32.totalorder %s18, 0
      %p150 = por %p148, %p149
      %p151 = scmp.ne.s32.totalorder %s143, %s145
      %p152 = scmp.eq.s32.totalorder %s23, 1
      %p153 = por %p151, %p152
      %p154 = scmp.ne.s32.totalorder %s145, %s146
      %p155 = scmp.eq.s32.totalorder %s23, 0
      %p156 = por %p154, %p155
      %p157 = scmp.ne.s32.totalorder %s145, %s146
      %p158 = scmp.eq.s32.totalorder %s24, 1
      %p159 = por %p157, %p158
      %p161 = scmp.ne.s32.totalorder %s146, %s160
      %p162 = scmp.eq.s32.totalorder %s24, 0
      %p163 = por %p161, %p162
      %s165 = sadd.s32 %s164, 1
      %p168 = scmp.eq.s32.totalorder %s18, 1
      %p169 = scmp.ne.s32.totalorder %s164, %s166
      %p170 = scmp.eq.s32.totalorder %s18, 0
      %p171 = por %p169, %p170
      %p172 = scmp.ne.s32.totalorder %s164, %s166
      %p173 = scmp.eq.s32.totalorder %s23, 1
      %p174 = por %p172, %p173
      %p175 = scmp.ne.s32.totalorder %s166, %s167
      %p176 = scmp.eq.s32.totalorder %s23, 0
      %p177 = por %p175, %p176
      %p178 = scmp.ne.s32.totalorder %s166, %s167
      %p179 = scmp.eq.s32.totalorder %s24, 1
      %p180 = por %p178, %p179
      %p182 = scmp.ne.s32.totalorder %s167, %s181
      %p183 = scmp.eq.s32.totalorder %s24, 0
      %p184 = por %p182, %p183
      %s185 = ssub.s32 %s25, %s44
      %s186 = ssub.s32 %s26, %s40
      %s187 = sor.u32 %s185, %s186
      %s188 = ssub.s32 %s27, %s36
      %s189 = sor.u32 %s187, %s188
      %p190 = scmp.eq.s32.totalorder %s189, 0
      %s192 = sadd.s32 %s191, 1
      %s193 = scalar_select %p190, %s191, %s192
      %p196 = pneg %p190
      %p197 = scmp.eq.s32.totalorder %s18, 1
      %p198 = por %p196, %p197
      %p199 = scmp.ne.s32.totalorder %s191, %s194
      %p200 = scmp.eq.s32.totalorder %s18, 0
      %p201 = por %p199, %p200
      %p202 = scmp.ne.s32.totalorder %s191, %s194
      %p203 = scmp.eq.s32.totalorder %s23, 1
      %p204 = por %p202, %p203
      %p205 = scmp.ne.s32.totalorder %s194, %s195
      %p206 = scmp.eq.s32.totalorder %s23, 0
      %p207 = por %p205, %p206
      %p208 = scmp.ne.s32.totalorder %s194, %s195
      %p209 = scmp.eq.s32.totalorder %s24, 1
      %p210 = por %p208, %p209
      %p212 = scmp.ne.s32.totalorder %s195, %s211
      %p213 = scmp.eq.s32.totalorder %s24, 0
      %p214 = por %p212, %p213
      %p215 = scmp.le.s32.totalorder 1, %s18
      %p216 = scmp.lt.s32.totalorder %s18, 3
      %p217 = pnand %p215, %p216
      %p218 = pneg %p217
      // Predicated region
      $region9: #{tpu_custom_call.1} parent=5 // pred_check
        _
      $region10: #{tpu_custom_call.1} parent=5 // pred_check_branch
        %220 = sbr.rel (%p217) target = $region12
      $region11: #{tpu_custom_call.1} parent=5 // pred_region
        %s221 = ssub.s32 %s18, 1
        // Predicated region
        $region13: #{tpu_custom_call.1} parent=11 // pred_check
          %p222 = pneg %p114
        $region14: #{tpu_custom_call.1} parent=11 // pred_check_branch
          %224 = sbr.rel (%p222) target = $region16
        $region15: #{tpu_custom_call.1} parent=11 // pred_region
          _
        $region16: #{tpu_custom_call.1} parent=11 // pred_fallthru
          _
        // Predicated region
        $region17: #{tpu_custom_call.1} parent=11 // pred_check
          %p225 = pneg %p135
        $region18: #{tpu_custom_call.1} parent=11 // pred_check_branch
          %227 = sbr.rel (%p225) target = $region20
        $region19: #{tpu_custom_call.1} parent=11 // pred_region
          _
        $region20: #{tpu_custom_call.1} parent=11 // pred_fallthru
          _
        // Predicated region
        $region21: #{tpu_custom_call.1} parent=11 // pred_check
          %p228 = pneg %p156
        $region22: #{tpu_custom_call.1} parent=11 // pred_check_branch
          %230 = sbr.rel (%p228) target = $region24
        $region23: #{tpu_custom_call.1} parent=11 // pred_region
          _
        $region24: #{tpu_custom_call.1} parent=11 // pred_fallthru
          _
        // Predicated region
        $region25: #{tpu_custom_call.1} parent=11 // pred_check
          %p231 = pneg %p177
        $region26: #{tpu_custom_call.1} parent=11 // pred_check_branch
          %233 = sbr.rel (%p231) target = $region28
        $region27: #{tpu_custom_call.1} parent=11 // pred_region
          _
        $region28: #{tpu_custom_call.1} parent=11 // pred_fallthru
          _
      $region12: #{tpu_custom_call.1} parent=5 // pred_fallthru
        _
      %p234 = scmp.lt.s32.totalorder %s18, 2
      // Predicated region
      $region29: #{tpu_custom_call.1} parent=5 // pred_check
        %p235 = pneg %p234
      $region30: #{tpu_custom_call.1} parent=5 // pred_check_branch
        %237 = sbr.rel (%p235) target = $region32
      $region31: #{tpu_custom_call.1} parent=5 // pred_region
        // Predicated region
        $region33: #{tpu_custom_call.1} parent=31 // pred_check
          %p238 = pneg %p59
        $region34: #{tpu_custom_call.1} parent=31 // pred_check_branch
          %240 = sbr.rel (%p238) target = $region36
        $region35: #{tpu_custom_call.1} parent=31 // pred_region
          %s241 = sand.u32 %s49, 1
          %s242 = scalar_lea.sflag [#allocation3], %s241
          %s243 = sand.u32 %s49, 1
          %s244 = smul.addr %s243, 8
          %s245 = scalar_lea.vmem [#allocation2], %s244
          %s247 = ssub.s32 128, 128
          %248 = vsyncadd %s242, %s247
          %s249 = sadd.s32 %s26, %s25
          %s250 = smul.addr %s249, 128
          %s251 = scalar_lea.hbm %s0, %s250
          %s253 = sshll.u32 %s245, 4
          %s254 = int_to_ptr.vmem [resolvable:$true] %s253
          %256 = dma.hbm_to_vmem [thread:$0]  %s251, 128, %s254, %s242
        $region36: #{tpu_custom_call.1} parent=31 // pred_fallthru
          _
        // Predicated region
        $region37: #{tpu_custom_call.1} parent=31 // pred_check
          %p257 = pneg %p87
        $region38: #{tpu_custom_call.1} parent=31 // pred_check_branch
          %259 = sbr.rel (%p257) target = $region40
        $region39: #{tpu_custom_call.1} parent=31 // pred_region
          %s260 = sand.u32 %s77, 1
          %s261 = scalar_lea.sflag [#allocation5], %s260
          %s262 = sand.u32 %s77, 1
          %s263 = smul.addr %s262, 8
          %s264 = scalar_lea.vmem [#allocation4], %s263
          %s266 = ssub.s32 128, 128
          %267 = vsyncadd %s261, %s266
          %s268 = sadd.s32 %s27, %s25
          %s269 = smul.addr %s268, 128
          %s270 = scalar_lea.hbm %s1, %s269
          %s272 = sshll.u32 %s264, 4
          %s273 = int_to_ptr.vmem [resolvable:$true] %s272
          %275 = dma.hbm_to_vmem [thread:$0]  %s270, 128, %s273, %s261
        $region40: #{tpu_custom_call.1} parent=31 // pred_fallthru
          _
      $region32: #{tpu_custom_call.1} parent=5 // pred_fallthru
        _
      %p276 = scmp.le.s32.totalorder 1, %s18
      %p277 = scmp.lt.s32.totalorder %s18, 3
      %p278 = pnand %p276, %p277
      %p279 = pneg %p278
      // Predicated region
      $region41: #{tpu_custom_call.1} parent=5 // pred_check
        _
      $region42: #{tpu_custom_call.1} parent=5 // pred_check_branch
        %281 = sbr.rel (%p278) target = $region44
      $region43: #{tpu_custom_call.1} parent=5 // pred_region
        %s282 = ssub.s32 %s18, 1
        %s283 = sand.u32 %s52, 1
        %s284 = scalar_lea.sflag [#allocation3], %s283
        %s285 = sand.u32 %s52, 1
        %s286 = smul.addr %s285, 8
        %s287 = scalar_lea.vmem [#allocation2], %s286
        // Predicated region
        $region45: #{tpu_custom_call.1} parent=43 // pred_check
          %p288 = pneg %p65
        $region46: #{tpu_custom_call.1} parent=43 // pred_check_branch
          %290 = sbr.rel (%p288) target = $region48
        $region47: #{tpu_custom_call.1} parent=43 // pred_region
          %291 = dma.done %s284, 128
        $region48: #{tpu_custom_call.1} parent=43 // pred_fallthru
          _
        %s292 = sand.u32 %s80, 1
        %s293 = scalar_lea.sflag [#allocation5], %s292
        %s294 = sand.u32 %s80, 1
        %s295 = smul.addr %s294, 8
        %s296 = scalar_lea.vmem [#allocation4], %s295
        // Predicated region
        $region49: #{tpu_custom_call.1} parent=43 // pred_check
          %p297 = pneg %p93
        $region50: #{tpu_custom_call.1} parent=43 // pred_check_branch
          %299 = sbr.rel (%p297) target = $region52
        $region51: #{tpu_custom_call.1} parent=43 // pred_region
          %300 = dma.done %s293, 128
        $region52: #{tpu_custom_call.1} parent=43 // pred_fallthru
          _
        %s301 = sand.u32 %s52, 1
        %s302 = scalar_lea.sflag [#allocation3], %s301
        %s303 = sand.u32 %s52, 1
        %s304 = smul.addr %s303, 8
        %s305 = scalar_lea.vmem [#allocation2], %s304
        %p306 = pneg %p65
        %p307 = pneg %p62
        %s308 = sand.u32 %s80, 1
        %s309 = scalar_lea.sflag [#allocation5], %s308
        %s310 = sand.u32 %s80, 1
        %s311 = smul.addr %s310, 8
        %s312 = scalar_lea.vmem [#allocation4], %s311
        %p313 = pneg %p93
        %p314 = pneg %p90
        %p315 = pneg %p114
        %p316 = pneg %p111
        %p317 = pneg %p135
        %p318 = pneg %p132
        %p319 = pneg %p156
        %p320 = pneg %p153
        %p321 = pneg %p177
        %p322 = pneg %p174
        %p323 = pneg %p207
        %p324 = pneg %p204
        %s325 = smul.u32 8, %s29
        %p326 = scmp.lt.s32.totalorder %s28, 1
        %s327 = scalar_select %p326, %s28, 1
        %p328 = scmp.lt.s32.totalorder %s325, 7
        %s329 = scalar_select %p328, %s325, 7
        %p330 = scmp.lt.s32.totalorder %s30, 0
        %s331 = scalar_select %p330, %s30, 0
        %s332 = sadd.s32 %s331, %s329
        %s333 = smul.addr %s327, 8
        %s334 = sadd.s32 %s332, %s333
        %s335 = smul.addr %s334, 8
        %s336 = scalar_lea.vmem %s6, %s335
        %s337 = smul.u32 8, %s29
        %p338 = scmp.lt.s32.totalorder %s28, 1
        %s339 = scalar_select %p338, %s28, 1
        %p340 = scmp.lt.s32.totalorder %s337, 7
        %s341 = scalar_select %p340, %s337, 7
        %p342 = scmp.lt.s32.totalorder %s30, 0
        %s343 = scalar_select %p342, %s30, 0
        %s344 = sadd.s32 %s343, %s341
        %s345 = smul.addr %s339, 8
        %s346 = sadd.s32 %s344, %s345
        %s347 = smul.addr %s346, 8
        %s348 = scalar_lea.vmem %s6, %s347
        %s349 = smul.u32 8, %s29
        %v350 = vld [vmem:[%s2] sm:$0xff]
        %v351 = vld [vmem:[%s2 + $0x8] sm:$0xff]
        %v352 = vld [vmem:[%s2 + $0x10] sm:$0xff]
        %v353 = vld [vmem:[%s2 + $0x18] sm:$0xff]
        %v354 = vld [vmem:[%s3] sm:$0x1]
        %v355 = vld [vmem:[%s4] sm:$0xff]
        %v356 = vld [vmem:[%s4 + $0x8] sm:$0xff]
        %v357 = vld [vmem:[%s4 + $0x10] sm:$0xff]
        %v358 = vld [vmem:[%s4 + $0x18] sm:$0xff]
        %v359 = vld [vmem:[%s5] sm:$0x1]
        %v360 = vld [vmem:[%s296] sm:$0xff]
        %v361 = vld [vmem:[%s287] sm:$0xff]
        %v363 = vcombine.high %v361, %v361
        %v365 = vunpack.c.l.s4 1966171168
        %v366 = vunpack.c.0.s8 %v365
        %v367 = vlaneseq
        %v368 = vshrl.u32 %v367, 7
        %v369 = vsub.s32 %v366, %v368
        %v370 = vrot.slane %v361, %v369
        %v372 = vunpack.c.l.s4 1966171168
        %v373 = vunpack.c.0.s8 %v372
        %v374 = vlaneseq
        %v375 = vshrl.u32 %v374, 7
        %v376 = vsub.s32 %v373, %v375
        %v377 = vrot.slane %v363, %v376
        %v378 = vcombine.high %v370, %v370
        %v379 = vcombine.high %v377, %v377
        %v381 = vunpack.c.l.s4 1966171168
        %v382 = vunpack.c.0.s8 %v381
        %v383 = vlaneseq
        %v384 = vshrl.u32 %v383, 7
        %v385 = vsub.s32 %v382, %v384
        %v386 = vrot.slane %v370, %v385
        %v388 = vunpack.c.l.s4 1966171168
        %v389 = vunpack.c.0.s8 %v388
        %v390 = vlaneseq
        %v391 = vshrl.u32 %v390, 7
        %v392 = vsub.s32 %v389, %v391
        %v393 = vrot.slane %v377, %v392
        %v395 = vunpack.c.l.s4 1966171168
        %v396 = vunpack.c.0.s8 %v395
        %v397 = vlaneseq
        %v398 = vshrl.u32 %v397, 7
        %v399 = vsub.s32 %v396, %v398
        %v400 = vrot.slane %v378, %v399
        %v402 = vunpack.c.l.s4 1966171168
        %v403 = vunpack.c.0.s8 %v402
        %v404 = vlaneseq
        %v405 = vshrl.u32 %v404, 7
        %v406 = vsub.s32 %v403, %v405
        %v407 = vrot.slane %v379, %v406
        %v408 = vcombine.high %v386, %v386
        %v409 = vcombine.high %v393, %v393
        %v410 = vcombine.high %v400, %v400
        %v411 = vcombine.high %v407, %v407
        %v412 = vlaneseq
        %v413 = vshrl.u32 %v412, 7
        %v414 = vsub.s32 0, %v413
        %v415 = vrot.slane %v386, %v414
        %v416 = vlaneseq
        %v417 = vshrl.u32 %v416, 7
        %v418 = vsub.s32 0, %v417
        %v419 = vrot.slane %v400, %v418
        %v420 = vlaneseq
        %v421 = vshrl.u32 %v420, 7
        %v422 = vsub.s32 0, %v421
        %v423 = vrot.slane %v408, %v422
        %v424 = vlaneseq
        %v425 = vshrl.u32 %v424, 7
        %v426 = vsub.s32 0, %v425
        %v427 = vrot.slane %v410, %v426
        %v428 = vlaneseq
        %v429 = vshrl.u32 %v428, 7
        %v430 = vsub.s32 0, %v429
        %v431 = vrot.slane %v393, %v430
        %v432 = vlaneseq
        %v433 = vshrl.u32 %v432, 7
        %v434 = vsub.s32 0, %v433
        %v435 = vrot.slane %v407, %v434
        %v436 = vlaneseq
        %v437 = vshrl.u32 %v436, 7
        %v438 = vsub.s32 0, %v437
        %v439 = vrot.slane %v409, %v438
        %v440 = vlaneseq
        %v441 = vshrl.u32 %v440, 7
        %v442 = vsub.s32 0, %v441
        %v443 = vrot.slane %v411, %v442
        %v452 = vadd.f32 %v415, %v360
        %v453 = vadd.f32 %v419, %v360
        %v454 = vadd.f32 %v423, %v360
        %v455 = vadd.f32 %v427, %v360
        %v456 = vadd.f32 %v431, %v360
        %v457 = vadd.f32 %v435, %v360
        %v458 = vadd.f32 %v439, %v360
        %v459 = vadd.f32 %v443, %v360
        %v460 = vmax.f32 %v452, 0.0
        %v461 = vmax.f32 %v453, 0.0
        %v462 = vmax.f32 %v454, 0.0
        %v463 = vmax.f32 %v455, 0.0
        %v464 = vmax.f32 %v456, 0.0
        %v465 = vmax.f32 %v457, 0.0
        %v466 = vmax.f32 %v458, 0.0
        %v467 = vmax.f32 %v459, 0.0
        %v469 = vlaneseq
        %v470 = vshrl.u32 %v469, 7
        %v471 = vsub.s32 0, %v470
        %v472 = vrot.slane %v354, %v471
        %vm474 = vcmask 261120
        %v476 = vsel %vm474, %v460, 0
        %v479 = vsel %vm474, %v461, 0
        %v482 = vsel %vm474, %v462, 0
        %v485 = vsel %vm474, %v463, 0
        %v488 = vsel %vm474, %v464, 0
        %v491 = vsel %vm474, %v465, 0
        %v494 = vsel %vm474, %v466, 0
        %v497 = vsel %vm474, %v467, 0
        %499 = vmatprep.subr.mxu0 0.0
        %v500 = vand.u32 %v350, 4294901760
        %501 = vmatpush1.msra.mxu0 %v500
        %502 = vmatprep.subr.mxu0 0.0
        %v503 = vand.u32 %v351, 4294901760
        %504 = vmatpush1.msra.mxu0 %v503
        %505 = vmatprep.subr.mxu0 0.0
        %v506 = vand.u32 %v352, 4294901760
        %507 = vmatpush1.msra.mxu0 %v506
        %508 = vmatprep.subr.mxu0 0.0
        %v509 = vand.u32 %v353, 4294901760
        %510 = vmatpush1.msra.mxu0 %v509
        %511 = vmatprep.subr.mxu0 0.0
        %512 = vmatpush1.msra.mxu0 0.0
        %513 = vmatprep.subr.mxu0 0.0
        %514 = vmatpush1.msra.mxu0 0.0
        %515 = vmatprep.subr.mxu0 0.0
        %516 = vmatpush1.msra.mxu0 0.0
        %517 = vmatprep.subr.mxu0 0.0
        %518 = vmatpush1.msra.mxu0 0.0
        %519 = vmatprep.subr.mxu0 0.0
        %520 = vmatpush1.msra.mxu0 0.0
        %521 = vmatprep.subr.mxu0 0.0
        %522 = vmatpush1.msra.mxu0 0.0
        %523 = vmatprep.subr.mxu0 0.0
        %524 = vmatpush1.msra.mxu0 0.0
        %525 = vmatprep.subr.mxu0 0.0
        %526 = vmatpush1.msra.mxu0 0.0
        %527 = vmatprep.subr.mxu0 0.0
        %528 = vmatpush1.msra.mxu0 0.0
        %529 = vmatprep.subr.mxu0 0.0
        %530 = vmatpush1.msra.mxu0 0.0
        %531 = vmatprep.subr.mxu0 0.0
        %532 = vmatpush1.msra.mxu0 0.0
        %533 = vmatprep.subr.mxu0 0.0
        %534 = vmatpush1.msra.mxu0 0.0
        %535 = vmatprep.subr.mxu0 0.0
        %536 = vmatpush1.msra.mxu0 0.0
        %537 = vmatprep.subr.mxu0 0.0
        %538 = vmatpush1.msra.mxu0 0.0
        %539 = vmatprep.subr.mxu0 0.0
        %540 = vmatpush1.msra.mxu0 0.0
        %541 = vmatprep.subr.mxu0 0.0
        %542 = vmatpush1.msra.mxu0 0.0
        %543 = vmatprep.subr.mxu0 0.0
        %544 = vmatpush1.msra.mxu0 0.0
        %545 = vmatprep.subr.mxu0 0.0
        %546 = vmatpush1.msra.mxu0 0.0
        %547 = vmatprep.subr.mxu0 0.0
        %548 = vmatpush1.msra.mxu0 0.0
        %549 = vmatprep.subr.mxu0 0.0
        %550 = vmatpush1.msra.mxu0 0.0
        %551 = vmatprep.subr.mxu0 0.0
        %552 = vmatpush1.msra.mxu0 0.0
        %553 = vmatprep.subr.mxu0 0.0
        %554 = vmatpush1.msra.mxu0 0.0
        %555 = vmatprep.subr.mxu0 0.0
        %556 = vmatpush1.msra.mxu0 0.0
        %557 = vmatprep.subr.mxu0 0.0
        %558 = vmatpush1.msra.mxu0 0.0
        %559 = vmatprep.subr.mxu0 0.0
        %560 = vmatpush1.msra.mxu0 0.0
        %561 = vmatprep.subr.mxu0 0.0
        %562 = vmatpush1.msra.mxu0 0.0
        %563 = vmatprep.subr.mxu0 0.0
        %564 = vmatpush1.msra.mxu0 0.0
        %565 = vmatprep.subr.mxu0 0.0
        %566 = vmatpush1.msra.mxu0 0.0
        %567 = vmatprep.mubr.f32.mxu0 0.0
        %v568 = vand.u32 %v476, 4294901760
        %v569 = vsub.f32 %v476, %v568
        %v570 = vand.u32 %v569, 4294901760
        %v571 = vsub.f32 %v569, %v570
        %v572 = vand.u32 %v571, 4294901760
        %573 = vmatmul.mubr.f32.gmra.mrb[0].mxu0 %v572
        %v574 = vpop.f32.mrb[0].mxu0
        %v575 = vadd.f32 %v472, %v574
        %v576 = vpop.f32.mrb[0].mxu0
        %577 = vmatprep.mubr.f32.mxu0 0.0
        %v578 = vand.u32 %v479, 4294901760
        %v579 = vsub.f32 %v479, %v578
        %v580 = vand.u32 %v579, 4294901760
        %v581 = vsub.f32 %v579, %v580
        %v582 = vand.u32 %v581, 4294901760
        %583 = vmatmul.mubr.f32.gmra.mrb[0].mxu0 %v582
        %v584 = vpop.f32.mrb[0].mxu0
        %v585 = vadd.f32 %v472, %v584
        %v586 = vpop.f32.mrb[0].mxu0
        %587 = vmatprep.mubr.f32.mxu0 0.0
        %v588 = vand.u32 %v482, 4294901760
        %v589 = vsub.f32 %v482, %v588
        %v590 = vand.u32 %v589, 4294901760
        %v591 = vsub.f32 %v589, %v590
        %v592 = vand.u32 %v591, 4294901760
        %593 = vmatmul.mubr.f32.gmra.mrb[0].mxu0 %v592
        %v594 = vpop.f32.mrb[0].mxu0
        %v595 = vadd.f32 %v472, %v594
        %v596 = vpop.f32.mrb[0].mxu0
        %597 = vmatprep.mubr.f32.mxu0 0.0
        %v598 = vand.u32 %v485, 4294901760
        %v599 = vsub.f32 %v485, %v598
        %v600 = vand.u32 %v599, 4294901760
        %v601 = vsub.f32 %v599, %v600
        %v602 = vand.u32 %v601, 4294901760
        %603 = vmatmul.mubr.f32.gmra.mrb[0].mxu0 %v602
        %v604 = vpop.f32.mrb[0].mxu0
        %v605 = vadd.f32 %v472, %v604
        %v606 = vpop.f32.mrb[0].mxu0
        %607 = vmatprep.mubr.f32.mxu0 0.0
        %v608 = vand.u32 %v488, 4294901760
        %v609 = vsub.f32 %v488, %v608
        %v610 = vand.u32 %v609, 4294901760
        %v611 = vsub.f32 %v609, %v610
        %v612 = vand.u32 %v611, 4294901760
        %613 = vmatmul.mubr.f32.gmra.mrb[0].mxu0 %v612
        %v614 = vpop.f32.mrb[0].mxu0
        %v615 = vadd.f32 %v472, %v614
        %v616 = vpop.f32.mrb[0].mxu0
        %617 = vmatprep.mubr.f32.mxu0 0.0
        %v618 = vand.u32 %v491, 4294901760
        %v619 = vsub.f32 %v491, %v618
        %v620 = vand.u32 %v619, 4294901760
        %v621 = vsub.f32 %v619, %v620
        %v622 = vand.u32 %v621, 4294901760
        %623 = vmatmul.mubr.f32.gmra.mrb[0].mxu0 %v622
        %v624 = vpop.f32.mrb[0].mxu0
        %v625 = vadd.f32 %v472, %v624
        %v626 = vpop.f32.mrb[0].mxu0
        %627 = vmatprep.mubr.f32.mxu0 0.0
        %v628 = vand.u32 %v494, 4294901760
        %v629 = vsub.f32 %v494, %v628
        %v630 = vand.u32 %v629, 4294901760
        %v631 = vsub.f32 %v629, %v630
        %v632 = vand.u32 %v631, 4294901760
        %633 = vmatmul.mubr.f32.gmra.mrb[0].mxu0 %v632
        %v634 = vpop.f32.mrb[0].mxu0
        %v635 = vadd.f32 %v472, %v634
        %v636 = vpop.f32.mrb[0].mxu0
        %637 = vmatprep.mubr.f32.mxu0 0.0
        %v638 = vand.u32 %v497, 4294901760
        %v639 = vsub.f32 %v497, %v638
        %v640 = vand.u32 %v639, 4294901760
        %v641 = vsub.f32 %v639, %v640
        %v642 = vand.u32 %v641, 4294901760
        %643 = vmatmul.mubr.f32.gmra.mrb[0].mxu0 %v642
        %v644 = vpop.f32.mrb[0].mxu0
        %v645 = vadd.f32 %v472, %v644
        %v646 = vpop.f32.mrb[0].mxu0
        %647 = vdwg.mxu0
        %648 = vmatprep.subr.mxu0 0.0
        %v649 = vand.u32 %v350, 4294901760
        %v650 = vsub.f32 %v350, %v649
        %v651 = vand.u32 %v650, 4294901760
        %v652 = vsub.f32 %v650, %v651
        %v653 = vand.u32 %v652, 4294901760
        %654 = vmatpush1.msra.mxu0 %v653
        %655 = vmatprep.subr.mxu0 0.0
        %v656 = vand.u32 %v351, 4294901760
        %v657 = vsub.f32 %v351, %v656
        %v658 = vand.u32 %v657, 4294901760
        %v659 = vsub.f32 %v657, %v658
        %v660 = vand.u32 %v659, 4294901760
        %661 = vmatpush1.msra.mxu0 %v660
        %662 = vmatprep.subr.mxu0 0.0
        %v663 = vand.u32 %v352, 4294901760
        %v664 = vsub.f32 %v352, %v663
        %v665 = vand.u32 %v664, 4294901760
        %v666 = vsub.f32 %v664, %v665
        %v667 = vand.u32 %v666, 4294901760
        %668 = vmatpush1.msra.mxu0 %v667
        %669 = vmatprep.subr.mxu0 0.0
        %v670 = vand.u32 %v353, 4294901760
        %v671 = vsub.f32 %v353, %v670
        %v672 = vand.u32 %v671, 4294901760
        %v673 = vsub.f32 %v671, %v672
        %v674 = vand.u32 %v673, 4294901760
        %675 = vmatpush1.msra.mxu0 %v674
        %676 = vmatprep.subr.mxu0 0.0
        %677 = vmatpush1.msra.mxu0 0.0
        %678 = vmatprep.subr.mxu0 0.0
        %679 = vmatpush1.msra.mxu0 0.0
        %680 = vmatprep.subr.mxu0 0.0
        %681 = vmatpush1.msra.mxu0 0.0
        %682 = vmatprep.subr.mxu0 0.0
        %683 = vmatpush1.msra.mxu0 0.0
        %684 = vmatprep.subr.mxu0 0.0
        %685 = vmatpush1.msra.mxu0 0.0
        %686 = vmatprep.subr.mxu0 0.0
        %687 = vmatpush1.msra.mxu0 0.0
        %688 = vmatprep.subr.mxu0 0.0
        %689 = vmatpush1.msra.mxu0 0.0
        %690 = vmatprep.subr.mxu0 0.0
        %691 = vmatpush1.msra.mxu0 0.0
        %692 = vmatprep.subr.mxu0 0.0
        %693 = vmatpush1.msra.mxu0 0.0
        %694 = vmatprep.subr.mxu0 0.0
        %695 = vmatpush1.msra.mxu0 0.0
        %696 = vmatprep.subr.mxu0 0.0
        %697 = vmatpush1.msra.mxu0 0.0
        %698 = vmatprep.subr.mxu0 0.0
        %699 = vmatpush1.msra.mxu0 0.0
        %700 = vmatprep.subr.mxu0 0.0
        %701 = vmatpush1.msra.mxu0 0.0
        %702 = vmatprep.subr.mxu0 0.0
        %703 = vmatpush1.msra.mxu0 0.0
        %704 = vmatprep.subr.mxu0 0.0
        %705 = vmatpush1.msra.mxu0 0.0
        %706 = vmatprep.subr.mxu0 0.0
        %707 = vmatpush1.msra.mxu0 0.0
        %708 = vmatprep.subr.mxu0 0.0
        %709 = vmatpush1.msra.mxu0 0.0
        %710 = vmatprep.subr.mxu0 0.0
        %711 = vmatpush1.msra.mxu0 0.0
        %712 = vmatprep.subr.mxu0 0.0
        %713 = vmatpush1.msra.mxu0 0.0
        %714 = vmatprep.subr.mxu0 0.0
        %715 = vmatpush1.msra.mxu0 0.0
        %716 = vmatprep.subr.mxu0 0.0
        %717 = vmatpush1.msra.mxu0 0.0
        %718 = vmatprep.subr.mxu0 0.0
        %719 = vmatpush1.msra.mxu0 0.0
        %720 = vmatprep.subr.mxu0 0.0
        %721 = vmatpush1.msra.mxu0 0.0
        %722 = vmatprep.subr.mxu0 0.0
        %723 = vmatpush1.msra.mxu0 0.0
        %724 = vmatprep.subr.mxu0 0.0
        %725 = vmatpush1.msra.mxu0 0.0
        %726 = vmatprep.subr.mxu0 0.0
        %727 = vmatpush1.msra.mxu0 0.0
        %728 = vmatprep.subr.mxu0 0.0
        %729 = vmatpush1.msra.mxu0 0.0
        %730 = vmatprep.subr.mxu0 0.0
        %731 = vmatpush1.msra.mxu0 0.0
        %732 = vmatprep.mubr.f32.mxu0 0.0
        %v733 = vand.u32 %v476, 4294901760
        %734 = vmatmul.mubr.f32.gmra.mrb[0].mxu0 %v733
        %v735 = vpop.f32.mrb[0].mxu0
        %v736 = vadd.f32 %v575, %v735
        %v737 = vpop.f32.mrb[0].mxu0
        %738 = vmatprep.mubr.f32.mxu0 0.0
        %v739 = vand.u32 %v479, 4294901760
        %740 = vmatmul.mubr.f32.gmra.mrb[0].mxu0 %v739
        %v741 = vpop.f32.mrb[0].mxu0
        %v742 = vadd.f32 %v585, %v741
        %v743 = vpop.f32.mrb[0].mxu0
        %744 = vmatprep.mubr.f32.mxu0 0.0
        %v745 = vand.u32 %v482, 4294901760
        %746 = vmatmul.mubr.f32.gmra.mrb[0].mxu0 %v745
        %v747 = vpop.f32.mrb[0].mxu0
        %v748 = vadd.f32 %v595, %v747
        %v749 = vpop.f32.mrb[0].mxu0
        %750 = vmatprep.mubr.f32.mxu0 0.0
        %v751 = vand.u32 %v485, 4294901760
        %752 = vmatmul.mubr.f32.gmra.mrb[0].mxu0 %v751
        %v753 = vpop.f32.mrb[0].mxu0
        %v754 = vadd.f32 %v605, %v753
        %v755 = vpop.f32.mrb[0].mxu0
        %756 = vmatprep.mubr.f32.mxu0 0.0
        %v757 = vand.u32 %v488, 4294901760
        %758 = vmatmul.mubr.f32.gmra.mrb[0].mxu0 %v757
        %v759 = vpop.f32.mrb[0].mxu0
        %v760 = vadd.f32 %v615, %v759
        %v761 = vpop.f32.mrb[0].mxu0
        %762 = vmatprep.mubr.f32.mxu0 0.0
        %v763 = vand.u32 %v491, 4294901760
        %764 = vmatmul.mubr.f32.gmra.mrb[0].mxu0 %v763
        %v765 = vpop.f32.mrb[0].mxu0
        %v766 = vadd.f32 %v625, %v765
        %v767 = vpop.f32.mrb[0].mxu0
        %768 = vmatprep.mubr.f32.mxu0 0.0
        %v769 = vand.u32 %v494, 4294901760
        %770 = vmatmul.mubr.f32.gmra.mrb[0].mxu0 %v769
        %v771 = vpop.f32.mrb[0].mxu0
        %v772 = vadd.f32 %v635, %v771
        %v773 = vpop.f32.mrb[0].mxu0
        %774 = vmatprep.mubr.f32.mxu0 0.0
        %v775 = vand.u32 %v497, 4294901760
        %776 = vmatmul.mubr.f32.gmra.mrb[0].mxu0 %v775
        %v777 = vpop.f32.mrb[0].mxu0
        %v778 = vadd.f32 %v645, %v777
        %v779 = vpop.f32.mrb[0].mxu0
        %780 = vdwg.mxu0
        %781 = vmatprep.subr.mxu0 0.0
        %v782 = vand.u32 %v350, 4294901760
        %v783 = vsub.f32 %v350, %v782
        %784 = vmatpush1.msra.mxu0 %v783
        %785 = vmatprep.subr.mxu0 0.0
        %v786 = vand.u32 %v351, 4294901760
        %v787 = vsub.f32 %v351, %v786
        %788 = vmatpush1.msra.mxu0 %v787
        %789 = vmatprep.subr.mxu0 0.0
        %v790 = vand.u32 %v352, 4294901760
        %v791 = vsub.f32 %v352, %v790
        %792 = vmatpush1.msra.mxu0 %v791
        %793 = vmatprep.subr.mxu0 0.0
        %v794 = vand.u32 %v353, 4294901760
        %v795 = vsub.f32 %v353, %v794
        %796 = vmatpush1.msra.mxu0 %v795
        %797 = vmatprep.subr.mxu0 0.0
        %798 = vmatpush1.msra.mxu0 0.0
        %799 = vmatprep.subr.mxu0 0.0
        %800 = vmatpush1.msra.mxu0 0.0
        %801 = vmatprep.subr.mxu0 0.0
        %802 = vmatpush1.msra.mxu0 0.0
        %803 = vmatprep.subr.mxu0 0.0
        %804 = vmatpush1.msra.mxu0 0.0
        %805 = vmatprep.subr.mxu0 0.0
        %806 = vmatpush1.msra.mxu0 0.0
        %807 = vmatprep.subr.mxu0 0.0
        %808 = vmatpush1.msra.mxu0 0.0
        %809 = vmatprep.subr.mxu0 0.0
        %810 = vmatpush1.msra.mxu0 0.0
        %811 = vmatprep.subr.mxu0 0.0
        %812 = vmatpush1.msra.mxu0 0.0
        %813 = vmatprep.subr.mxu0 0.0
        %814 = vmatpush1.msra.mxu0 0.0
        %815 = vmatprep.subr.mxu0 0.0
        %816 = vmatpush1.msra.mxu0 0.0
        %817 = vmatprep.subr.mxu0 0.0
        %818 = vmatpush1.msra.mxu0 0.0
        %819 = vmatprep.subr.mxu0 0.0
        %820 = vmatpush1.msra.mxu0 0.0
        %821 = vmatprep.subr.mxu0 0.0
        %822 = vmatpush1.msra.mxu0 0.0
        %823 = vmatprep.subr.mxu0 0.0
        %824 = vmatpush1.msra.mxu0 0.0
        %825 = vmatprep.subr.mxu0 0.0
        %826 = vmatpush1.msra.mxu0 0.0
        %827 = vmatprep.subr.mxu0 0.0
        %828 = vmatpush1.msra.mxu0 0.0
        %829 = vmatprep.subr.mxu0 0.0
        %830 = vmatpush1.msra.mxu0 0.0
        %831 = vmatprep.subr.mxu0 0.0
        %832 = vmatpush1.msra.mxu0 0.0
        %833 = vmatprep.subr.mxu0 0.0
        %834 = vmatpush1.msra.mxu0 0.0
        %835 = vmatprep.subr.mxu0 0.0
        %836 = vmatpush1.msra.mxu0 0.0
        %837 = vmatprep.subr.mxu0 0.0
        %838 = vmatpush1.msra.mxu0 0.0
        %839 = vmatprep.subr.mxu0 0.0
        %840 = vmatpush1.msra.mxu0 0.0
        %841 = vmatprep.subr.mxu0 0.0
        %842 = vmatpush1.msra.mxu0 0.0
        %843 = vmatprep.subr.mxu0 0.0
        %844 = vmatpush1.msra.mxu0 0.0
        %845 = vmatprep.subr.mxu0 0.0
        %846 = vmatpush1.msra.mxu0 0.0
        %847 = vmatprep.subr.mxu0 0.0
        %848 = vmatpush1.msra.mxu0 0.0
        %849 = vmatprep.subr.mxu0 0.0
        %850 = vmatpush1.msra.mxu0 0.0
        %851 = vmatprep.subr.mxu0 0.0
        %852 = vmatpush1.msra.mxu0 0.0
        %853 = vmatprep.mubr.f32.mxu0 0.0
        %v854 = vand.u32 %v476, 4294901760
        %v855 = vsub.f32 %v476, %v854
        %856 = vmatmul.mubr.f32.gmra.mrb[0].mxu0 %v855
        %v857 = vpop.f32.mrb[0].mxu0
        %v858 = vadd.f32 %v736, %v857
        %v859 = vpop.f32.mrb[0].mxu0
        %860 = vmatprep.mubr.f32.mxu0 0.0
        %v861 = vand.u32 %v479, 4294901760
        %v862 = vsub.f32 %v479, %v861
        %863 = vmatmul.mubr.f32.gmra.mrb[0].mxu0 %v862
        %v864 = vpop.f32.mrb[0].mxu0
        %v865 = vadd.f32 %v742, %v864
        %v866 = vpop.f32.mrb[0].mxu0
        %867 = vmatprep.mubr.f32.mxu0 0.0
        %v868 = vand.u32 %v482, 4294901760
        %v869 = vsub.f32 %v482, %v868
        %870 = vmatmul.mubr.f32.gmra.mrb[0].mxu0 %v869
        %v871 = vpop.f32.mrb[0].mxu0
        %v872 = vadd.f32 %v748, %v871
        %v873 = vpop.f32.mrb[0].mxu0
        %874 = vmatprep.mubr.f32.mxu0 0.0
        %v875 = vand.u32 %v485, 4294901760
        %v876 = vsub.f32 %v485, %v875
        %877 = vmatmul.mubr.f32.gmra.mrb[0].mxu0 %v876
        %v878 = vpop.f32.mrb[0].mxu0
        %v879 = vadd.f32 %v754, %v878
        %v880 = vpop.f32.mrb[0].mxu0
        %881 = vmatprep.mubr.f32.mxu0 0.0
        %v882 = vand.u32 %v488, 4294901760
        %v883 = vsub.f32 %v488, %v882
        %884 = vmatmul.mubr.f32.gmra.mrb[0].mxu0 %v883
        %v885 = vpop.f32.mrb[0].mxu0
        %v886 = vadd.f32 %v760, %v885
        %v887 = vpop.f32.mrb[0].mxu0
        %888 = vmatprep.mubr.f32.mxu0 0.0
        %v889 = vand.u32 %v491, 4294901760
        %v890 = vsub.f32 %v491, %v889
        %891 = vmatmul.mubr.f32.gmra.mrb[0].mxu0 %v890
        %v892 = vpop.f32.mrb[0].mxu0
        %v893 = vadd.f32 %v766, %v892
        %v894 = vpop.f32.mrb[0].mxu0
        %895 = vmatprep.mubr.f32.mxu0 0.0
        %v896 = vand.u32 %v494, 4294901760
        %v897 = vsub.f32 %v494, %v896
        %898 = vmatmul.mubr.f32.gmra.mrb[0].mxu0 %v897
        %v899 = vpop.f32.mrb[0].mxu0
        %v900 = vadd.f32 %v772, %v899
        %v901 = vpop.f32.mrb[0].mxu0
        %902 = vmatprep.mubr.f32.mxu0 0.0
        %v903 = vand.u32 %v497, 4294901760
        %v904 = vsub.f32 %v497, %v903
        %905 = vmatmul.mubr.f32.gmra.mrb[0].mxu0 %v904
        %v906 = vpop.f32.mrb[0].mxu0
        %v907 = vadd.f32 %v778, %v906
        %v908 = vpop.f32.mrb[0].mxu0
        %909 = vdwg.mxu0
        %910 = vmatprep.subr.mxu0 0.0
        %v911 = vand.u32 %v350, 4294901760
        %912 = vmatpush1.msra.mxu0 %v911
        %913 = vmatprep.subr.mxu0 0.0
        %v914 = vand.u32 %v351, 4294901760
        %915 = vmatpush1.msra.mxu0 %v914
        %916 = vmatprep.subr.mxu0 0.0
        %v917 = vand.u32 %v352, 4294901760
        %918 = vmatpush1.msra.mxu0 %v917
        %919 = vmatprep.subr.mxu0 0.0
        %v920 = vand.u32 %v353, 4294901760
        %921 = vmatpush1.msra.mxu0 %v920
        %922 = vmatprep.subr.mxu0 0.0
        %923 = vmatpush1.msra.mxu0 0.0
        %924 = vmatprep.subr.mxu0 0.0
        %925 = vmatpush1.msra.mxu0 0.0
        %926 = vmatprep.subr.mxu0 0.0
        %927 = vmatpush1.msra.mxu0 0.0
        %928 = vmatprep.subr.mxu0 0.0
        %929 = vmatpush1.msra.mxu0 0.0
        %930 = vmatprep.subr.mxu0 0.0
        %931 = vmatpush1.msra.mxu0 0.0
        %932 = vmatprep.subr.mxu0 0.0
        %933 = vmatpush1.msra.mxu0 0.0
        %934 = vmatprep.subr.mxu0 0.0
        %935 = vmatpush1.msra.mxu0 0.0
        %936 = vmatprep.subr.mxu0 0.0
        %937 = vmatpush1.msra.mxu0 0.0
        %938 = vmatprep.subr.mxu0 0.0
        %939 = vmatpush1.msra.mxu0 0.0
        %940 = vmatprep.subr.mxu0 0.0
        %941 = vmatpush1.msra.mxu0 0.0
        %942 = vmatprep.subr.mxu0 0.0
        %943 = vmatpush1.msra.mxu0 0.0
        %944 = vmatprep.subr.mxu0 0.0
        %945 = vmatpush1.msra.mxu0 0.0
        %946 = vmatprep.subr.mxu0 0.0
        %947 = vmatpush1.msra.mxu0 0.0
        %948 = vmatprep.subr.mxu0 0.0
        %949 = vmatpush1.msra.mxu0 0.0
        %950 = vmatprep.subr.mxu0 0.0
        %951 = vmatpush1.msra.mxu0 0.0
        %952 = vmatprep.subr.mxu0 0.0
        %953 = vmatpush1.msra.mxu0 0.0
        %954 = vmatprep.subr.mxu0 0.0
        %955 = vmatpush1.msra.mxu0 0.0
        %956 = vmatprep.subr.mxu0 0.0
        %957 = vmatpush1.msra.mxu0 0.0
        %958 = vmatprep.subr.mxu0 0.0
        %959 = vmatpush1.msra.mxu0 0.0
        %960 = vmatprep.subr.mxu0 0.0
        %961 = vmatpush1.msra.mxu0 0.0
        %962 = vmatprep.subr.mxu0 0.0
        %963 = vmatpush1.msra.mxu0 0.0
        %964 = vmatprep.subr.mxu0 0.0
        %965 = vmatpush1.msra.mxu0 0.0
        %966 = vmatprep.subr.mxu0 0.0
        %967 = vmatpush1.msra.mxu0 0.0
        %968 = vmatprep.subr.mxu0 0.0
        %969 = vmatpush1.msra.mxu0 0.0
        %970 = vmatprep.subr.mxu0 0.0
        %971 = vmatpush1.msra.mxu0 0.0
        %972 = vmatprep.subr.mxu0 0.0
        %973 = vmatpush1.msra.mxu0 0.0
        %974 = vmatprep.subr.mxu0 0.0
        %975 = vmatpush1.msra.mxu0 0.0
        %976 = vmatprep.subr.mxu0 0.0
        %977 = vmatpush1.msra.mxu0 0.0
        %978 = vmatprep.mubr.f32.mxu0 0.0
        %v979 = vand.u32 %v476, 4294901760
        %v980 = vsub.f32 %v476, %v979
        %v981 = vand.u32 %v980, 4294901760
        %982 = vmatmul.mubr.f32.gmra.mrb[0].mxu0 %v981
        %v983 = vpop.f32.mrb[0].mxu0
        %v984 = vadd.f32 %v858, %v983
        %v985 = vpop.f32.mrb[0].mxu0
        %986 = vmatprep.mubr.f32.mxu0 0.0
        %v987 = vand.u32 %v479, 4294901760
        %v988 = vsub.f32 %v479, %v987
        %v989 = vand.u32 %v988, 4294901760
        %990 = vmatmul.mubr.f32.gmra.mrb[0].mxu0 %v989
        %v991 = vpop.f32.mrb[0].mxu0
        %v992 = vadd.f32 %v865, %v991
        %v993 = vpop.f32.mrb[0].mxu0
        %994 = vmatprep.mubr.f32.mxu0 0.0
        %v995 = vand.u32 %v482, 4294901760
        %v996 = vsub.f32 %v482, %v995
        %v997 = vand.u32 %v996, 4294901760
        %998 = vmatmul.mubr.f32.gmra.mrb[0].mxu0 %v997
        %v999 = vpop.f32.mrb[0].mxu0
        %v1000 = vadd.f32 %v872, %v999
        %v1001 = vpop.f32.mrb[0].mxu0
        %1002 = vmatprep.mubr.f32.mxu0 0.0
        %v1003 = vand.u32 %v485, 4294901760
        %v1004 = vsub.f32 %v485, %v1003
        %v1005 = vand.u32 %v1004, 4294901760
        %1006 = vmatmul.mubr.f32.gmra.mrb[0].mxu0 %v1005
        %v1007 = vpop.f32.mrb[0].mxu0
        %v1008 = vadd.f32 %v879, %v1007
        %v1009 = vpop.f32.mrb[0].mxu0
        %1010 = vmatprep.mubr.f32.mxu0 0.0
        %v1011 = vand.u32 %v488, 4294901760
        %v1012 = vsub.f32 %v488, %v1011
        %v1013 = vand.u32 %v1012, 4294901760
        %1014 = vmatmul.mubr.f32.gmra.mrb[0].mxu0 %v1013
        %v1015 = vpop.f32.mrb[0].mxu0
        %v1016 = vadd.f32 %v886, %v1015
        %v1017 = vpop.f32.mrb[0].mxu0
        %1018 = vmatprep.mubr.f32.mxu0 0.0
        %v1019 = vand.u32 %v491, 4294901760
        %v1020 = vsub.f32 %v491, %v1019
        %v1021 = vand.u32 %v1020, 4294901760
        %1022 = vmatmul.mubr.f32.gmra.mrb[0].mxu0 %v1021
        %v1023 = vpop.f32.mrb[0].mxu0
        %v1024 = vadd.f32 %v893, %v1023
        %v1025 = vpop.f32.mrb[0].mxu0
        %1026 = vmatprep.mubr.f32.mxu0 0.0
        %v1027 = vand.u32 %v494, 4294901760
        %v1028 = vsub.f32 %v494, %v1027
        %v1029 = vand.u32 %v1028, 4294901760
        %1030 = vmatmul.mubr.f32.gmra.mrb[0].mxu0 %v1029
        %v1031 = vpop.f32.mrb[0].mxu0
        %v1032 = vadd.f32 %v900, %v1031
        %v1033 = vpop.f32.mrb[0].mxu0
        %1034 = vmatprep.mubr.f32.mxu0 0.0
        %v1035 = vand.u32 %v497, 4294901760
        %v1036 = vsub.f32 %v497, %v1035
        %v1037 = vand.u32 %v1036, 4294901760
        %1038 = vmatmul.mubr.f32.gmra.mrb[0].mxu0 %v1037
        %v1039 = vpop.f32.mrb[0].mxu0
        %v1040 = vadd.f32 %v907, %v1039
        %v1041 = vpop.f32.mrb[0].mxu0
        %1042 = vdwg.mxu0
        %1043 = vmatprep.subr.mxu0 0.0
        %v1044 = vand.u32 %v350, 4294901760
        %v1045 = vsub.f32 %v350, %v1044
        %v1046 = vand.u32 %v1045, 4294901760
        %1047 = vmatpush1.msra.mxu0 %v1046
        %1048 = vmatprep.subr.mxu0 0.0
        %v1049 = vand.u32 %v351, 4294901760
        %v1050 = vsub.f32 %v351, %v1049
        %v1051 = vand.u32 %v1050, 4294901760
        %1052 = vmatpush1.msra.mxu0 %v1051
        %1053 = vmatprep.subr.mxu0 0.0
        %v1054 = vand.u32 %v352, 4294901760
        %v1055 = vsub.f32 %v352, %v1054
        %v1056 = vand.u32 %v1055, 4294901760
        %1057 = vmatpush1.msra.mxu0 %v1056
        %1058 = vmatprep.subr.mxu0 0.0
        %v1059 = vand.u32 %v353, 4294901760
        %v1060 = vsub.f32 %v353, %v1059
        %v1061 = vand.u32 %v1060, 4294901760
        %1062 = vmatpush1.msra.mxu0 %v1061
        %1063 = vmatprep.subr.mxu0 0.0
        %1064 = vmatpush1.msra.mxu0 0.0
        %1065 = vmatprep.subr.mxu0 0.0
        %1066 = vmatpush1.msra.mxu0 0.0
        %1067 = vmatprep.subr.mxu0 0.0
        %1068 = vmatpush1.msra.mxu0 0.0
        %1069 = vmatprep.subr.mxu0 0.0
        %1070 = vmatpush1.msra.mxu0 0.0
        %1071 = vmatprep.subr.mxu0 0.0
        %1072 = vmatpush1.msra.mxu0 0.0
        %1073 = vmatprep.subr.mxu0 0.0
        %1074 = vmatpush1.msra.mxu0 0.0
        %1075 = vmatprep.subr.mxu0 0.0
        %1076 = vmatpush1.msra.mxu0 0.0
        %1077 = vmatprep.subr.mxu0 0.0
        %1078 = vmatpush1.msra.mxu0 0.0
        %1079 = vmatprep.subr.mxu0 0.0
        %1080 = vmatpush1.msra.mxu0 0.0
        %1081 = vmatprep.subr.mxu0 0.0
        %1082 = vmatpush1.msra.mxu0 0.0
        %1083 = vmatprep.subr.mxu0 0.0
        %1084 = vmatpush1.msra.mxu0 0.0
        %1085 = vmatprep.subr.mxu0 0.0
        %1086 = vmatpush1.msra.mxu0 0.0
        %1087 = vmatprep.subr.mxu0 0.0
        %1088 = vmatpush1.msra.mxu0 0.0
        %1089 = vmatprep.subr.mxu0 0.0
        %1090 = vmatpush1.msra.mxu0 0.0
        %1091 = vmatprep.subr.mxu0 0.0
        %1092 = vmatpush1.msra.mxu0 0.0
        %1093 = vmatprep.subr.mxu0 0.0
        %1094 = vmatpush1.msra.mxu0 0.0
        %1095 = vmatprep.subr.mxu0 0.0
        %1096 = vmatpush1.msra.mxu0 0.0
        %1097 = vmatprep.subr.mxu0 0.0
        %1098 = vmatpush1.msra.mxu0 0.0
        %1099 = vmatprep.subr.mxu0 0.0
        %1100 = vmatpush1.msra.mxu0 0.0
        %1101 = vmatprep.subr.mxu0 0.0
        %1102 = vmatpush1.msra.mxu0 0.0
        %1103 = vmatprep.subr.mxu0 0.0
        %1104 = vmatpush1.msra.mxu0 0.0
        %1105 = vmatprep.subr.mxu0 0.0
        %1106 = vmatpush1.msra.mxu0 0.0
        %1107 = vmatprep.subr.mxu0 0.0
        %1108 = vmatpush1.msra.mxu0 0.0
        %1109 = vmatprep.subr.mxu0 0.0
        %1110 = vmatpush1.msra.mxu0 0.0
        %1111 = vmatprep.subr.mxu0 0.0
        %1112 = vmatpush1.msra.mxu0 0.0
        %1113 = vmatprep.subr.mxu0 0.0
        %1114 = vmatpush1.msra.mxu0 0.0
        %1115 = vmatprep.subr.mxu0 0.0
        %1116 = vmatpush1.msra.mxu0 0.0
        %1117 = vmatprep.subr.mxu0 0.0
        %1118 = vmatpush1.msra.mxu0 0.0
        %1119 = vmatprep.mubr.f32.mxu0 0.0
        %v1120 = vand.u32 %v476, 4294901760
        %1121 = vmatmul.mubr.f32.gmra.mrb[0].mxu0 %v1120
        %v1122 = vpop.f32.mrb[0].mxu0
        %v1123 = vadd.f32 %v984, %v1122
        %v1124 = vpop.f32.mrb[0].mxu0
        %1125 = vmatprep.mubr.f32.mxu0 0.0
        %v1126 = vand.u32 %v479, 4294901760
        %1127 = vmatmul.mubr.f32.gmra.mrb[0].mxu0 %v1126
        %v1128 = vpop.f32.mrb[0].mxu0
        %v1129 = vadd.f32 %v992, %v1128
        %v1130 = vpop.f32.mrb[0].mxu0
        %1131 = vmatprep.mubr.f32.mxu0 0.0
        %v1132 = vand.u32 %v482, 4294901760
        %1133 = vmatmul.mubr.f32.gmra.mrb[0].mxu0 %v1132
        %v1134 = vpop.f32.mrb[0].mxu0
        %v1135 = vadd.f32 %v1000, %v1134
        %v1136 = vpop.f32.mrb[0].mxu0
        %1137 = vmatprep.mubr.f32.mxu0 0.0
        %v1138 = vand.u32 %v485, 4294901760
        %1139 = vmatmul.mubr.f32.gmra.mrb[0].mxu0 %v1138
        %v1140 = vpop.f32.mrb[0].mxu0
        %v1141 = vadd.f32 %v1008, %v1140
        %v1142 = vpop.f32.mrb[0].mxu0
        %1143 = vmatprep.mubr.f32.mxu0 0.0
        %v1144 = vand.u32 %v488, 4294901760
        %1145 = vmatmul.mubr.f32.gmra.mrb[0].mxu0 %v1144
        %v1146 = vpop.f32.mrb[0].mxu0
        %v1147 = vadd.f32 %v1016, %v1146
        %v1148 = vpop.f32.mrb[0].mxu0
        %1149 = vmatprep.mubr.f32.mxu0 0.0
        %v1150 = vand.u32 %v491, 4294901760
        %1151 = vmatmul.mubr.f32.gmra.mrb[0].mxu0 %v1150
        %v1152 = vpop.f32.mrb[0].mxu0
        %v1153 = vadd.f32 %v1024, %v1152
        %v1154 = vpop.f32.mrb[0].mxu0
        %1155 = vmatprep.mubr.f32.mxu0 0.0
        %v1156 = vand.u32 %v494, 4294901760
        %1157 = vmatmul.mubr.f32.gmra.mrb[0].mxu0 %v1156
        %v1158 = vpop.f32.mrb[0].mxu0
        %v1159 = vadd.f32 %v1032, %v1158
        %v1160 = vpop.f32.mrb[0].mxu0
        %1161 = vmatprep.mubr.f32.mxu0 0.0
        %v1162 = vand.u32 %v497, 4294901760
        %1163 = vmatmul.mubr.f32.gmra.mrb[0].mxu0 %v1162
        %v1164 = vpop.f32.mrb[0].mxu0
        %v1165 = vadd.f32 %v1040, %v1164
        %v1166 = vpop.f32.mrb[0].mxu0
        %1167 = vdwg.mxu0
        %1168 = vmatprep.subr.mxu0 0.0
        %v1169 = vand.u32 %v350, 4294901760
        %1170 = vmatpush1.msra.mxu0 %v1169
        %1171 = vmatprep.subr.mxu0 0.0
        %v1172 = vand.u32 %v351, 4294901760
        %1173 = vmatpush1.msra.mxu0 %v1172
        %1174 = vmatprep.subr.mxu0 0.0
        %v1175 = vand.u32 %v352, 4294901760
        %1176 = vmatpush1.msra.mxu0 %v1175
        %1177 = vmatprep.subr.mxu0 0.0
        %v1178 = vand.u32 %v353, 4294901760
        %1179 = vmatpush1.msra.mxu0 %v1178
        %1180 = vmatprep.subr.mxu0 0.0
        %1181 = vmatpush1.msra.mxu0 0.0
        %1182 = vmatprep.subr.mxu0 0.0
        %1183 = vmatpush1.msra.mxu0 0.0
        %1184 = vmatprep.subr.mxu0 0.0
        %1185 = vmatpush1.msra.mxu0 0.0
        %1186 = vmatprep.subr.mxu0 0.0
        %1187 = vmatpush1.msra.mxu0 0.0
        %1188 = vmatprep.subr.mxu0 0.0
        %1189 = vmatpush1.msra.mxu0 0.0
        %1190 = vmatprep.subr.mxu0 0.0
        %1191 = vmatpush1.msra.mxu0 0.0
        %1192 = vmatprep.subr.mxu0 0.0
        %1193 = vmatpush1.msra.mxu0 0.0
        %1194 = vmatprep.subr.mxu0 0.0
        %1195 = vmatpush1.msra.mxu0 0.0
        %1196 = vmatprep.subr.mxu0 0.0
        %1197 = vmatpush1.msra.mxu0 0.0
        %1198 = vmatprep.subr.mxu0 0.0
        %1199 = vmatpush1.msra.mxu0 0.0
        %1200 = vmatprep.subr.mxu0 0.0
        %1201 = vmatpush1.msra.mxu0 0.0
        %1202 = vmatprep.subr.mxu0 0.0
        %1203 = vmatpush1.msra.mxu0 0.0
        %1204 = vmatprep.subr.mxu0 0.0
        %1205 = vmatpush1.msra.mxu0 0.0
        %1206 = vmatprep.subr.mxu0 0.0
        %1207 = vmatpush1.msra.mxu0 0.0
        %1208 = vmatprep.subr.mxu0 0.0
        %1209 = vmatpush1.msra.mxu0 0.0
        %1210 = vmatprep.subr.mxu0 0.0
        %1211 = vmatpush1.msra.mxu0 0.0
        %1212 = vmatprep.subr.mxu0 0.0
        %1213 = vmatpush1.msra.mxu0 0.0
        %1214 = vmatprep.subr.mxu0 0.0
        %1215 = vmatpush1.msra.mxu0 0.0
        %1216 = vmatprep.subr.mxu0 0.0
        %1217 = vmatpush1.msra.mxu0 0.0
        %1218 = vmatprep.subr.mxu0 0.0
        %1219 = vmatpush1.msra.mxu0 0.0
        %1220 = vmatprep.subr.mxu0 0.0
        %1221 = vmatpush1.msra.mxu0 0.0
        %1222 = vmatprep.subr.mxu0 0.0
        %1223 = vmatpush1.msra.mxu0 0.0
        %1224 = vmatprep.subr.mxu0 0.0
        %1225 = vmatpush1.msra.mxu0 0.0
        %1226 = vmatprep.subr.mxu0 0.0
        %1227 = vmatpush1.msra.mxu0 0.0
        %1228 = vmatprep.subr.mxu0 0.0
        %1229 = vmatpush1.msra.mxu0 0.0
        %1230 = vmatprep.subr.mxu0 0.0
        %1231 = vmatpush1.msra.mxu0 0.0
        %1232 = vmatprep.subr.mxu0 0.0
        %1233 = vmatpush1.msra.mxu0 0.0
        %1234 = vmatprep.subr.mxu0 0.0
        %1235 = vmatpush1.msra.mxu0 0.0
        %1236 = vmatprep.mubr.f32.mxu0 0.0
        %v1237 = vand.u32 %v476, 4294901760
        %1238 = vmatmul.mubr.f32.gmra.mrb[0].mxu0 %v1237
        %v1239 = vpop.f32.mrb[0].mxu0
        %v1240 = vadd.f32 %v1123, %v1239
        %v1241 = vpop.f32.mrb[0].mxu0
        %1242 = vmatprep.mubr.f32.mxu0 0.0
        %v1243 = vand.u32 %v479, 4294901760
        %1244 = vmatmul.mubr.f32.gmra.mrb[0].mxu0 %v1243
        %v1245 = vpop.f32.mrb[0].mxu0
        %v1246 = vadd.f32 %v1129, %v1245
        %v1247 = vpop.f32.mrb[0].mxu0
        %1248 = vmatprep.mubr.f32.mxu0 0.0
        %v1249 = vand.u32 %v482, 4294901760
        %1250 = vmatmul.mubr.f32.gmra.mrb[0].mxu0 %v1249
        %v1251 = vpop.f32.mrb[0].mxu0
        %v1252 = vadd.f32 %v1135, %v1251
        %v1253 = vpop.f32.mrb[0].mxu0
        %1254 = vmatprep.mubr.f32.mxu0 0.0
        %v1255 = vand.u32 %v485, 4294901760
        %1256 = vmatmul.mubr.f32.gmra.mrb[0].mxu0 %v1255
        %v1257 = vpop.f32.mrb[0].mxu0
        %v1258 = vadd.f32 %v1141, %v1257
        %v1259 = vpop.f32.mrb[0].mxu0
        %1260 = vmatprep.mubr.f32.mxu0 0.0
        %v1261 = vand.u32 %v488, 4294901760
        %1262 = vmatmul.mubr.f32.gmra.mrb[0].mxu0 %v1261
        %v1263 = vpop.f32.mrb[0].mxu0
        %v1264 = vadd.f32 %v1147, %v1263
        %v1265 = vpop.f32.mrb[0].mxu0
        %1266 = vmatprep.mubr.f32.mxu0 0.0
        %v1267 = vand.u32 %v491, 4294901760
        %1268 = vmatmul.mubr.f32.gmra.mrb[0].mxu0 %v1267
        %v1269 = vpop.f32.mrb[0].mxu0
        %v1270 = vadd.f32 %v1153, %v1269
        %v1271 = vpop.f32.mrb[0].mxu0
        %1272 = vmatprep.mubr.f32.mxu0 0.0
        %v1273 = vand.u32 %v494, 4294901760
        %1274 = vmatmul.mubr.f32.gmra.mrb[0].mxu0 %v1273
        %v1275 = vpop.f32.mrb[0].mxu0
        %v1276 = vadd.f32 %v1159, %v1275
        %v1277 = vpop.f32.mrb[0].mxu0
        %1278 = vmatprep.mubr.f32.mxu0 0.0
        %v1279 = vand.u32 %v497, 4294901760
        %1280 = vmatmul.mubr.f32.gmra.mrb[0].mxu0 %v1279
        %v1281 = vpop.f32.mrb[0].mxu0
        %v1282 = vadd.f32 %v1165, %v1281
        %v1283 = vpop.f32.mrb[0].mxu0
        %1284 = vdwg.mxu0
        %v1285 = vmax.f32 %v1240, 0.0
        %v1286 = vmax.f32 %v1246, 0.0
        %v1287 = vmax.f32 %v1252, 0.0
        %v1288 = vmax.f32 %v1258, 0.0
        %v1289 = vmax.f32 %v1264, 0.0
        %v1290 = vmax.f32 %v1270, 0.0
        %v1291 = vmax.f32 %v1276, 0.0
        %v1292 = vmax.f32 %v1282, 0.0
        %v1294 = vlaneseq
        %v1295 = vshrl.u32 %v1294, 7
        %v1296 = vsub.s32 0, %v1295
        %v1297 = vrot.slane %v359, %v1296
        %v1300 = vsel %vm474, %v1285, 0
        %v1303 = vsel %vm474, %v1286, 0
        %v1306 = vsel %vm474, %v1287, 0
        %v1309 = vsel %vm474, %v1288, 0
        %v1312 = vsel %vm474, %v1289, 0
        %v1315 = vsel %vm474, %v1290, 0
        %v1318 = vsel %vm474, %v1291, 0
        %v1321 = vsel %vm474, %v1292, 0
        %1323 = vmatprep.subr.mxu0 0.0
        %v1324 = vand.u32 %v355, 4294901760
        %1325 = vmatpush1.msra.mxu0 %v1324
        %1326 = vmatprep.subr.mxu0 0.0
        %v1327 = vand.u32 %v356, 4294901760
        %1328 = vmatpush1.msra.mxu0 %v1327
        %1329 = vmatprep.subr.mxu0 0.0
        %v1330 = vand.u32 %v357, 4294901760
        %1331 = vmatpush1.msra.mxu0 %v1330
        %1332 = vmatprep.subr.mxu0 0.0
        %v1333 = vand.u32 %v358, 4294901760
        %1334 = vmatpush1.msra.mxu0 %v1333
        %1335 = vmatprep.subr.mxu0 0.0
        %1336 = vmatpush1.msra.mxu0 0.0
        %1337 = vmatprep.subr.mxu0 0.0
        %1338 = vmatpush1.msra.mxu0 0.0
        %1339 = vmatprep.subr.mxu0 0.0
        %1340 = vmatpush1.msra.mxu0 0.0
        %1341 = vmatprep.subr.mxu0 0.0
        %1342 = vmatpush1.msra.mxu0 0.0
        %1343 = vmatprep.subr.mxu0 0.0
        %1344 = vmatpush1.msra.mxu0 0.0
        %1345 = vmatprep.subr.mxu0 0.0
        %1346 = vmatpush1.msra.mxu0 0.0
        %1347 = vmatprep.subr.mxu0 0.0
        %1348 = vmatpush1.msra.mxu0 0.0
        %1349 = vmatprep.subr.mxu0 0.0
        %1350 = vmatpush1.msra.mxu0 0.0
        %1351 = vmatprep.subr.mxu0 0.0
        %1352 = vmatpush1.msra.mxu0 0.0
        %1353 = vmatprep.subr.mxu0 0.0
        %1354 = vmatpush1.msra.mxu0 0.0
        %1355 = vmatprep.subr.mxu0 0.0
        %1356 = vmatpush1.msra.mxu0 0.0
        %1357 = vmatprep.subr.mxu0 0.0
        %1358 = vmatpush1.msra.mxu0 0.0
        %1359 = vmatprep.subr.mxu0 0.0
        %1360 = vmatpush1.msra.mxu0 0.0
        %1361 = vmatprep.subr.mxu0 0.0
        %1362 = vmatpush1.msra.mxu0 0.0
        %1363 = vmatprep.subr.mxu0 0.0
        %1364 = vmatpush1.msra.mxu0 0.0
        %1365 = vmatprep.subr.mxu0 0.0
        %1366 = vmatpush1.msra.mxu0 0.0
        %1367 = vmatprep.subr.mxu0 0.0
        %1368 = vmatpush1.msra.mxu0 0.0
        %1369 = vmatprep.subr.mxu0 0.0
        %1370 = vmatpush1.msra.mxu0 0.0
        %1371 = vmatprep.subr.mxu0 0.0
        %1372 = vmatpush1.msra.mxu0 0.0
        %1373 = vmatprep.subr.mxu0 0.0
        %1374 = vmatpush1.msra.mxu0 0.0
        %1375 = vmatprep.subr.mxu0 0.0
        %1376 = vmatpush1.msra.mxu0 0.0
        %1377 = vmatprep.subr.mxu0 0.0
        %1378 = vmatpush1.msra.mxu0 0.0
        %1379 = vmatprep.subr.mxu0 0.0
        %1380 = vmatpush1.msra.mxu0 0.0
        %1381 = vmatprep.subr.mxu0 0.0
        %1382 = vmatpush1.msra.mxu0 0.0
        %1383 = vmatprep.subr.mxu0 0.0
        %1384 = vmatpush1.msra.mxu0 0.0
        %1385 = vmatprep.subr.mxu0 0.0
        %1386 = vmatpush1.msra.mxu0 0.0
        %1387 = vmatprep.subr.mxu0 0.0
        %1388 = vmatpush1.msra.mxu0 0.0
        %1389 = vmatprep.subr.mxu0 0.0
        %1390 = vmatpush1.msra.mxu0 0.0
        %1391 = vmatprep.mubr.f32.mxu0 0.0
        %v1392 = vand.u32 %v1300, 4294901760
        %v1393 = vsub.f32 %v1300, %v1392
        %v1394 = vand.u32 %v1393, 4294901760
        %v1395 = vsub.f32 %v1393, %v1394
        %v1396 = vand.u32 %v1395, 4294901760
        %1397 = vmatmul.mubr.f32.gmra.mrb[0].mxu0 %v1396
        %v1398 = vpop.f32.mrb[0].mxu0
        %v1399 = vadd.f32 %v1297, %v1398
        %v1400 = vpop.f32.mrb[0].mxu0
        %1401 = vmatprep.mubr.f32.mxu0 0.0
        %v1402 = vand.u32 %v1303, 4294901760
        %v1403 = vsub.f32 %v1303, %v1402
        %v1404 = vand.u32 %v1403, 4294901760
        %v1405 = vsub.f32 %v1403, %v1404
        %v1406 = vand.u32 %v1405, 4294901760
        %1407 = vmatmul.mubr.f32.gmra.mrb[0].mxu0 %v1406
        %v1408 = vpop.f32.mrb[0].mxu0
        %v1409 = vadd.f32 %v1297, %v1408
        %v1410 = vpop.f32.mrb[0].mxu0
        %1411 = vmatprep.mubr.f32.mxu0 0.0
        %v1412 = vand.u32 %v1306, 4294901760
        %v1413 = vsub.f32 %v1306, %v1412
        %v1414 = vand.u32 %v1413, 4294901760
        %v1415 = vsub.f32 %v1413, %v1414
        %v1416 = vand.u32 %v1415, 4294901760
        %1417 = vmatmul.mubr.f32.gmra.mrb[0].mxu0 %v1416
        %v1418 = vpop.f32.mrb[0].mxu0
        %v1419 = vadd.f32 %v1297, %v1418
        %v1420 = vpop.f32.mrb[0].mxu0
        %1421 = vmatprep.mubr.f32.mxu0 0.0
        %v1422 = vand.u32 %v1309, 4294901760
        %v1423 = vsub.f32 %v1309, %v1422
        %v1424 = vand.u32 %v1423, 4294901760
        %v1425 = vsub.f32 %v1423, %v1424
        %v1426 = vand.u32 %v1425, 4294901760
        %1427 = vmatmul.mubr.f32.gmra.mrb[0].mxu0 %v1426
        %v1428 = vpop.f32.mrb[0].mxu0
        %v1429 = vadd.f32 %v1297, %v1428
        %v1430 = vpop.f32.mrb[0].mxu0
        %1431 = vmatprep.mubr.f32.mxu0 0.0
        %v1432 = vand.u32 %v1312, 4294901760
        %v1433 = vsub.f32 %v1312, %v1432
        %v1434 = vand.u32 %v1433, 4294901760
        %v1435 = vsub.f32 %v1433, %v1434
        %v1436 = vand.u32 %v1435, 4294901760
        %1437 = vmatmul.mubr.f32.gmra.mrb[0].mxu0 %v1436
        %v1438 = vpop.f32.mrb[0].mxu0
        %v1439 = vadd.f32 %v1297, %v1438
        %v1440 = vpop.f32.mrb[0].mxu0
        %1441 = vmatprep.mubr.f32.mxu0 0.0
        %v1442 = vand.u32 %v1315, 4294901760
        %v1443 = vsub.f32 %v1315, %v1442
        %v1444 = vand.u32 %v1443, 4294901760
        %v1445 = vsub.f32 %v1443, %v1444
        %v1446 = vand.u32 %v1445, 4294901760
        %1447 = vmatmul.mubr.f32.gmra.mrb[0].mxu0 %v1446
        %v1448 = vpop.f32.mrb[0].mxu0
        %v1449 = vadd.f32 %v1297, %v1448
        %v1450 = vpop.f32.mrb[0].mxu0
        %1451 = vmatprep.mubr.f32.mxu0 0.0
        %v1452 = vand.u32 %v1318, 4294901760
        %v1453 = vsub.f32 %v1318, %v1452
        %v1454 = vand.u32 %v1453, 4294901760
        %v1455 = vsub.f32 %v1453, %v1454
        %v1456 = vand.u32 %v1455, 4294901760
        %1457 = vmatmul.mubr.f32.gmra.mrb[0].mxu0 %v1456
        %v1458 = vpop.f32.mrb[0].mxu0
        %v1459 = vadd.f32 %v1297, %v1458
        %v1460 = vpop.f32.mrb[0].mxu0
        %1461 = vmatprep.mubr.f32.mxu0 0.0
        %v1462 = vand.u32 %v1321, 4294901760
        %v1463 = vsub.f32 %v1321, %v1462
        %v1464 = vand.u32 %v1463, 4294901760
        %v1465 = vsub.f32 %v1463, %v1464
        %v1466 = vand.u32 %v1465, 4294901760
        %1467 = vmatmul.mubr.f32.gmra.mrb[0].mxu0 %v1466
        %v1468 = vpop.f32.mrb[0].mxu0
        %v1469 = vadd.f32 %v1297, %v1468
        %v1470 = vpop.f32.mrb[0].mxu0
        %1471 = vdwg.mxu0
        %1472 = vmatprep.subr.mxu0 0.0
        %v1473 = vand.u32 %v355, 4294901760
        %v1474 = vsub.f32 %v355, %v1473
        %v1475 = vand.u32 %v1474, 4294901760
        %v1476 = vsub.f32 %v1474, %v1475
        %v1477 = vand.u32 %v1476, 4294901760
        %1478 = vmatpush1.msra.mxu0 %v1477
        %1479 = vmatprep.subr.mxu0 0.0
        %v1480 = vand.u32 %v356, 4294901760
        %v1481 = vsub.f32 %v356, %v1480
        %v1482 = vand.u32 %v1481, 4294901760
        %v1483 = vsub.f32 %v1481, %v1482
        %v1484 = vand.u32 %v1483, 4294901760
        %1485 = vmatpush1.msra.mxu0 %v1484
        %1486 = vmatprep.subr.mxu0 0.0
        %v1487 = vand.u32 %v357, 4294901760
        %v1488 = vsub.f32 %v357, %v1487
        %v1489 = vand.u32 %v1488, 4294901760
        %v1490 = vsub.f32 %v1488, %v1489
        %v1491 = vand.u32 %v1490, 4294901760
        %1492 = vmatpush1.msra.mxu0 %v1491
        %1493 = vmatprep.subr.mxu0 0.0
        %v1494 = vand.u32 %v358, 4294901760
        %v1495 = vsub.f32 %v358, %v1494
        %v1496 = vand.u32 %v1495, 4294901760
        %v1497 = vsub.f32 %v1495, %v1496
        %v1498 = vand.u32 %v1497, 4294901760
        %1499 = vmatpush1.msra.mxu0 %v1498
        %1500 = vmatprep.subr.mxu0 0.0
        %1501 = vmatpush1.msra.mxu0 0.0
        %1502 = vmatprep.subr.mxu0 0.0
        %1503 = vmatpush1.msra.mxu0 0.0
        %1504 = vmatprep.subr.mxu0 0.0
        %1505 = vmatpush1.msra.mxu0 0.0
        %1506 = vmatprep.subr.mxu0 0.0
        %1507 = vmatpush1.msra.mxu0 0.0
        %1508 = vmatprep.subr.mxu0 0.0
        %1509 = vmatpush1.msra.mxu0 0.0
        %1510 = vmatprep.subr.mxu0 0.0
        %1511 = vmatpush1.msra.mxu0 0.0
        %1512 = vmatprep.subr.mxu0 0.0
        %1513 = vmatpush1.msra.mxu0 0.0
        %1514 = vmatprep.subr.mxu0 0.0
        %1515 = vmatpush1.msra.mxu0 0.0
        %1516 = vmatprep.subr.mxu0 0.0
        %1517 = vmatpush1.msra.mxu0 0.0
        %1518 = vmatprep.subr.mxu0 0.0
        %1519 = vmatpush1.msra.mxu0 0.0
        %1520 = vmatprep.subr.mxu0 0.0
        %1521 = vmatpush1.msra.mxu0 0.0
        %1522 = vmatprep.subr.mxu0 0.0
        %1523 = vmatpush1.msra.mxu0 0.0
        %1524 = vmatprep.subr.mxu0 0.0
        %1525 = vmatpush1.msra.mxu0 0.0
        %1526 = vmatprep.subr.mxu0 0.0
        %1527 = vmatpush1.msra.mxu0 0.0
        %1528 = vmatprep.subr.mxu0 0.0
        %1529 = vmatpush1.msra.mxu0 0.0
        %1530 = vmatprep.subr.mxu0 0.0
        %1531 = vmatpush1.msra.mxu0 0.0
        %1532 = vmatprep.subr.mxu0 0.0
        %1533 = vmatpush1.msra.mxu0 0.0
        %1534 = vmatprep.subr.mxu0 0.0
        %1535 = vmatpush1.msra.mxu0 0.0
        %1536 = vmatprep.subr.mxu0 0.0
        %1537 = vmatpush1.msra.mxu0 0.0
        %1538 = vmatprep.subr.mxu0 0.0
        %1539 = vmatpush1.msra.mxu0 0.0
        %1540 = vmatprep.subr.mxu0 0.0
        %1541 = vmatpush1.msra.mxu0 0.0
        %1542 = vmatprep.subr.mxu0 0.0
        %1543 = vmatpush1.msra.mxu0 0.0
        %1544 = vmatprep.subr.mxu0 0.0
        %1545 = vmatpush1.msra.mxu0 0.0
        %1546 = vmatprep.subr.mxu0 0.0
        %1547 = vmatpush1.msra.mxu0 0.0
        %1548 = vmatprep.subr.mxu0 0.0
        %1549 = vmatpush1.msra.mxu0 0.0
        %1550 = vmatprep.subr.mxu0 0.0
        %1551 = vmatpush1.msra.mxu0 0.0
        %1552 = vmatprep.subr.mxu0 0.0
        %1553 = vmatpush1.msra.mxu0 0.0
        %1554 = vmatprep.subr.mxu0 0.0
        %1555 = vmatpush1.msra.mxu0 0.0
        %1556 = vmatprep.mubr.f32.mxu0 0.0
        %v1557 = vand.u32 %v1300, 4294901760
        %1558 = vmatmul.mubr.f32.gmra.mrb[0].mxu0 %v1557
        %v1559 = vpop.f32.mrb[0].mxu0
        %v1560 = vadd.f32 %v1399, %v1559
        %v1561 = vpop.f32.mrb[0].mxu0
        %1562 = vmatprep.mubr.f32.mxu0 0.0
        %v1563 = vand.u32 %v1303, 4294901760
        %1564 = vmatmul.mubr.f32.gmra.mrb[0].mxu0 %v1563
        %v1565 = vpop.f32.mrb[0].mxu0
        %v1566 = vadd.f32 %v1409, %v1565
        %v1567 = vpop.f32.mrb[0].mxu0
        %1568 = vmatprep.mubr.f32.mxu0 0.0
        %v1569 = vand.u32 %v1306, 4294901760
        %1570 = vmatmul.mubr.f32.gmra.mrb[0].mxu0 %v1569
        %v1571 = vpop.f32.mrb[0].mxu0
        %v1572 = vadd.f32 %v1419, %v1571
        %v1573 = vpop.f32.mrb[0].mxu0
        %1574 = vmatprep.mubr.f32.mxu0 0.0
        %v1575 = vand.u32 %v1309, 4294901760
        %1576 = vmatmul.mubr.f32.gmra.mrb[0].mxu0 %v1575
        %v1577 = vpop.f32.mrb[0].mxu0
        %v1578 = vadd.f32 %v1429, %v1577
        %v1579 = vpop.f32.mrb[0].mxu0
        %1580 = vmatprep.mubr.f32.mxu0 0.0
        %v1581 = vand.u32 %v1312, 4294901760
        %1582 = vmatmul.mubr.f32.gmra.mrb[0].mxu0 %v1581
        %v1583 = vpop.f32.mrb[0].mxu0
        %v1584 = vadd.f32 %v1439, %v1583
        %v1585 = vpop.f32.mrb[0].mxu0
        %1586 = vmatprep.mubr.f32.mxu0 0.0
        %v1587 = vand.u32 %v1315, 4294901760
        %1588 = vmatmul.mubr.f32.gmra.mrb[0].mxu0 %v1587
        %v1589 = vpop.f32.mrb[0].mxu0
        %v1590 = vadd.f32 %v1449, %v1589
        %v1591 = vpop.f32.mrb[0].mxu0
        %1592 = vmatprep.mubr.f32.mxu0 0.0
        %v1593 = vand.u32 %v1318, 4294901760
        %1594 = vmatmul.mubr.f32.gmra.mrb[0].mxu0 %v1593
        %v1595 = vpop.f32.mrb[0].mxu0
        %v1596 = vadd.f32 %v1459, %v1595
        %v1597 = vpop.f32.mrb[0].mxu0
        %1598 = vmatprep.mubr.f32.mxu0 0.0
        %v1599 = vand.u32 %v1321, 4294901760
        %1600 = vmatmul.mubr.f32.gmra.mrb[0].mxu0 %v1599
        %v1601 = vpop.f32.mrb[0].mxu0
        %v1602 = vadd.f32 %v1469, %v1601
        %v1603 = vpop.f32.mrb[0].mxu0
        %1604 = vdwg.mxu0
        %1605 = vmatprep.subr.mxu0 0.0
        %v1606 = vand.u32 %v355, 4294901760
        %v1607 = vsub.f32 %v355, %v1606
        %1608 = vmatpush1.msra.mxu0 %v1607
        %1609 = vmatprep.subr.mxu0 0.0
        %v1610 = vand.u32 %v356, 4294901760
        %v1611 = vsub.f32 %v356, %v1610
        %1612 = vmatpush1.msra.mxu0 %v1611
        %1613 = vmatprep.subr.mxu0 0.0
        %v1614 = vand.u32 %v357, 4294901760
        %v1615 = vsub.f32 %v357, %v1614
        %1616 = vmatpush1.msra.mxu0 %v1615
        %1617 = vmatprep.subr.mxu0 0.0
        %v1618 = vand.u32 %v358, 4294901760
        %v1619 = vsub.f32 %v358, %v1618
        %1620 = vmatpush1.msra.mxu0 %v1619
        %1621 = vmatprep.subr.mxu0 0.0
        %1622 = vmatpush1.msra.mxu0 0.0
        %1623 = vmatprep.subr.mxu0 0.0
        %1624 = vmatpush1.msra.mxu0 0.0
        %1625 = vmatprep.subr.mxu0 0.0
        %1626 = vmatpush1.msra.mxu0 0.0
        %1627 = vmatprep.subr.mxu0 0.0
        %1628 = vmatpush1.msra.mxu0 0.0
        %1629 = vmatprep.subr.mxu0 0.0
        %1630 = vmatpush1.msra.mxu0 0.0
        %1631 = vmatprep.subr.mxu0 0.0
        %1632 = vmatpush1.msra.mxu0 0.0
        %1633 = vmatprep.subr.mxu0 0.0
        %1634 = vmatpush1.msra.mxu0 0.0
        %1635 = vmatprep.subr.mxu0 0.0
        %1636 = vmatpush1.msra.mxu0 0.0
        %1637 = vmatprep.subr.mxu0 0.0
        %1638 = vmatpush1.msra.mxu0 0.0
        %1639 = vmatprep.subr.mxu0 0.0
        %1640 = vmatpush1.msra.mxu0 0.0
        %1641 = vmatprep.subr.mxu0 0.0
        %1642 = vmatpush1.msra.mxu0 0.0
        %1643 = vmatprep.subr.mxu0 0.0
        %1644 = vmatpush1.msra.mxu0 0.0
        %1645 = vmatprep.subr.mxu0 0.0
        %1646 = vmatpush1.msra.mxu0 0.0
        %1647 = vmatprep.subr.mxu0 0.0
        %1648 = vmatpush1.msra.mxu0 0.0
        %1649 = vmatprep.subr.mxu0 0.0
        %1650 = vmatpush1.msra.mxu0 0.0
        %1651 = vmatprep.subr.mxu0 0.0
        %1652 = vmatpush1.msra.mxu0 0.0
        %1653 = vmatprep.subr.mxu0 0.0
        %1654 = vmatpush1.msra.mxu0 0.0
        %1655 = vmatprep.subr.mxu0 0.0
        %1656 = vmatpush1.msra.mxu0 0.0
        %1657 = vmatprep.subr.mxu0 0.0
        %1658 = vmatpush1.msra.mxu0 0.0
        %1659 = vmatprep.subr.mxu0 0.0
        %1660 = vmatpush1.msra.mxu0 0.0
        %1661 = vmatprep.subr.mxu0 0.0
        %1662 = vmatpush1.msra.mxu0 0.0
        %1663 = vmatprep.subr.mxu0 0.0
        %1664 = vmatpush1.msra.mxu0 0.0
        %1665 = vmatprep.subr.mxu0 0.0
        %1666 = vmatpush1.msra.mxu0 0.0
        %1667 = vmatprep.subr.mxu0 0.0
        %1668 = vmatpush1.msra.mxu0 0.0
        %1669 = vmatprep.subr.mxu0 0.0
        %1670 = vmatpush1.msra.mxu0 0.0
        %1671 = vmatprep.subr.mxu0 0.0
        %1672 = vmatpush1.msra.mxu0 0.0
        %1673 = vmatprep.subr.mxu0 0.0
        %1674 = vmatpush1.msra.mxu0 0.0
        %1675 = vmatprep.subr.mxu0 0.0
        %1676 = vmatpush1.msra.mxu0 0.0
        %1677 = vmatprep.mubr.f32.mxu0 0.0
        %v1678 = vand.u32 %v1300, 4294901760
        %v1679 = vsub.f32 %v1300, %v1678
        %1680 = vmatmul.mubr.f32.gmra.mrb[0].mxu0 %v1679
        %v1681 = vpop.f32.mrb[0].mxu0
        %v1682 = vadd.f32 %v1560, %v1681
        %v1683 = vpop.f32.mrb[0].mxu0
        %1684 = vmatprep.mubr.f32.mxu0 0.0
        %v1685 = vand.u32 %v1303, 4294901760
        %v1686 = vsub.f32 %v1303, %v1685
        %1687 = vmatmul.mubr.f32.gmra.mrb[0].mxu0 %v1686
        %v1688 = vpop.f32.mrb[0].mxu0
        %v1689 = vadd.f32 %v1566, %v1688
        %v1690 = vpop.f32.mrb[0].mxu0
        %1691 = vmatprep.mubr.f32.mxu0 0.0
        %v1692 = vand.u32 %v1306, 4294901760
        %v1693 = vsub.f32 %v1306, %v1692
        %1694 = vmatmul.mubr.f32.gmra.mrb[0].mxu0 %v1693
        %v1695 = vpop.f32.mrb[0].mxu0
        %v1696 = vadd.f32 %v1572, %v1695
        %v1697 = vpop.f32.mrb[0].mxu0
        %1698 = vmatprep.mubr.f32.mxu0 0.0
        %v1699 = vand.u32 %v1309, 4294901760
        %v1700 = vsub.f32 %v1309, %v1699
        %1701 = vmatmul.mubr.f32.gmra.mrb[0].mxu0 %v1700
        %v1702 = vpop.f32.mrb[0].mxu0
        %v1703 = vadd.f32 %v1578, %v1702
        %v1704 = vpop.f32.mrb[0].mxu0
        %1705 = vmatprep.mubr.f32.mxu0 0.0
        %v1706 = vand.u32 %v1312, 4294901760
        %v1707 = vsub.f32 %v1312, %v1706
        %1708 = vmatmul.mubr.f32.gmra.mrb[0].mxu0 %v1707
        %v1709 = vpop.f32.mrb[0].mxu0
        %v1710 = vadd.f32 %v1584, %v1709
        %v1711 = vpop.f32.mrb[0].mxu0
        %1712 = vmatprep.mubr.f32.mxu0 0.0
        %v1713 = vand.u32 %v1315, 4294901760
        %v1714 = vsub.f32 %v1315, %v1713
        %1715 = vmatmul.mubr.f32.gmra.mrb[0].mxu0 %v1714
        %v1716 = vpop.f32.mrb[0].mxu0
        %v1717 = vadd.f32 %v1590, %v1716
        %v1718 = vpop.f32.mrb[0].mxu0
        %1719 = vmatprep.mubr.f32.mxu0 0.0
        %v1720 = vand.u32 %v1318, 4294901760
        %v1721 = vsub.f32 %v1318, %v1720
        %1722 = vmatmul.mubr.f32.gmra.mrb[0].mxu0 %v1721
        %v1723 = vpop.f32.mrb[0].mxu0
        %v1724 = vadd.f32 %v1596, %v1723
        %v1725 = vpop.f32.mrb[0].mxu0
        %1726 = vmatprep.mubr.f32.mxu0 0.0
        %v1727 = vand.u32 %v1321, 4294901760
        %v1728 = vsub.f32 %v1321, %v1727
        %1729 = vmatmul.mubr.f32.gmra.mrb[0].mxu0 %v1728
        %v1730 = vpop.f32.mrb[0].mxu0
        %v1731 = vadd.f32 %v1602, %v1730
        %v1732 = vpop.f32.mrb[0].mxu0
        %1733 = vdwg.mxu0
        %1734 = vmatprep.subr.mxu0 0.0
        %v1735 = vand.u32 %v355, 4294901760
        %1736 = vmatpush1.msra.mxu0 %v1735
        %1737 = vmatprep.subr.mxu0 0.0
        %v1738 = vand.u32 %v356, 4294901760
        %1739 = vmatpush1.msra.mxu0 %v1738
        %1740 = vmatprep.subr.mxu0 0.0
        %v1741 = vand.u32 %v357, 4294901760
        %1742 = vmatpush1.msra.mxu0 %v1741
        %1743 = vmatprep.subr.mxu0 0.0
        %v1744 = vand.u32 %v358, 4294901760
        %1745 = vmatpush1.msra.mxu0 %v1744
        %1746 = vmatprep.subr.mxu0 0.0
        %1747 = vmatpush1.msra.mxu0 0.0
        %1748 = vmatprep.subr.mxu0 0.0
        %1749 = vmatpush1.msra.mxu0 0.0
        %1750 = vmatprep.subr.mxu0 0.0
        %1751 = vmatpush1.msra.mxu0 0.0
        %1752 = vmatprep.subr.mxu0 0.0
        %1753 = vmatpush1.msra.mxu0 0.0
        %1754 = vmatprep.subr.mxu0 0.0
        %1755 = vmatpush1.msra.mxu0 0.0
        %1756 = vmatprep.subr.mxu0 0.0
        %1757 = vmatpush1.msra.mxu0 0.0
        %1758 = vmatprep.subr.mxu0 0.0
        %1759 = vmatpush1.msra.mxu0 0.0
        %1760 = vmatprep.subr.mxu0 0.0
        %1761 = vmatpush1.msra.mxu0 0.0
        %1762 = vmatprep.subr.mxu0 0.0
        %1763 = vmatpush1.msra.mxu0 0.0
        %1764 = vmatprep.subr.mxu0 0.0
        %1765 = vmatpush1.msra.mxu0 0.0
        %1766 = vmatprep.subr.mxu0 0.0
        %1767 = vmatpush1.msra.mxu0 0.0
        %1768 = vmatprep.subr.mxu0 0.0
        %1769 = vmatpush1.msra.mxu0 0.0
        %1770 = vmatprep.subr.mxu0 0.0
        %1771 = vmatpush1.msra.mxu0 0.0
        %1772 = vmatprep.subr.mxu0 0.0
        %1773 = vmatpush1.msra.mxu0 0.0
        %1774 = vmatprep.subr.mxu0 0.0
        %1775 = vmatpush1.msra.mxu0 0.0
        %1776 = vmatprep.subr.mxu0 0.0
        %1777 = vmatpush1.msra.mxu0 0.0
        %1778 = vmatprep.subr.mxu0 0.0
        %1779 = vmatpush1.msra.mxu0 0.0
        %1780 = vmatprep.subr.mxu0 0.0
        %1781 = vmatpush1.msra.mxu0 0.0
        %1782 = vmatprep.subr.mxu0 0.0
        %1783 = vmatpush1.msra.mxu0 0.0
        %1784 = vmatprep.subr.mxu0 0.0
        %1785 = vmatpush1.msra.mxu0 0.0
        %1786 = vmatprep.subr.mxu0 0.0
        %1787 = vmatpush1.msra.mxu0 0.0
        %1788 = vmatprep.subr.mxu0 0.0
        %1789 = vmatpush1.msra.mxu0 0.0
        %1790 = vmatprep.subr.mxu0 0.0
        %1791 = vmatpush1.msra.mxu0 0.0
        %1792 = vmatprep.subr.mxu0 0.0
        %1793 = vmatpush1.msra.mxu0 0.0
        %1794 = vmatprep.subr.mxu0 0.0
        %1795 = vmatpush1.msra.mxu0 0.0
        %1796 = vmatprep.subr.mxu0 0.0
        %1797 = vmatpush1.msra.mxu0 0.0
        %1798 = vmatprep.subr.mxu0 0.0
        %1799 = vmatpush1.msra.mxu0 0.0
        %1800 = vmatprep.subr.mxu0 0.0
        %1801 = vmatpush1.msra.mxu0 0.0
        %1802 = vmatprep.mubr.f32.mxu0 0.0
        %v1803 = vand.u32 %v1300, 4294901760
        %v1804 = vsub.f32 %v1300, %v1803
        %v1805 = vand.u32 %v1804, 4294901760
        %1806 = vmatmul.mubr.f32.gmra.mrb[0].mxu0 %v1805
        %v1807 = vpop.f32.mrb[0].mxu0
        %v1808 = vadd.f32 %v1682, %v1807
        %v1809 = vpop.f32.mrb[0].mxu0
        %1810 = vmatprep.mubr.f32.mxu0 0.0
        %v1811 = vand.u32 %v1303, 4294901760
        %v1812 = vsub.f32 %v1303, %v1811
        %v1813 = vand.u32 %v1812, 4294901760
        %1814 = vmatmul.mubr.f32.gmra.mrb[0].mxu0 %v1813
        %v1815 = vpop.f32.mrb[0].mxu0
        %v1816 = vadd.f32 %v1689, %v1815
        %v1817 = vpop.f32.mrb[0].mxu0
        %1818 = vmatprep.mubr.f32.mxu0 0.0
        %v1819 = vand.u32 %v1306, 4294901760
        %v1820 = vsub.f32 %v1306, %v1819
        %v1821 = vand.u32 %v1820, 4294901760
        %1822 = vmatmul.mubr.f32.gmra.mrb[0].mxu0 %v1821
        %v1823 = vpop.f32.mrb[0].mxu0
        %v1824 = vadd.f32 %v1696, %v1823
        %v1825 = vpop.f32.mrb[0].mxu0
        %1826 = vmatprep.mubr.f32.mxu0 0.0
        %v1827 = vand.u32 %v1309, 4294901760
        %v1828 = vsub.f32 %v1309, %v1827
        %v1829 = vand.u32 %v1828, 4294901760
        %1830 = vmatmul.mubr.f32.gmra.mrb[0].mxu0 %v1829
        %v1831 = vpop.f32.mrb[0].mxu0
        %v1832 = vadd.f32 %v1703, %v1831
        %v1833 = vpop.f32.mrb[0].mxu0
        %1834 = vmatprep.mubr.f32.mxu0 0.0
        %v1835 = vand.u32 %v1312, 4294901760
        %v1836 = vsub.f32 %v1312, %v1835
        %v1837 = vand.u32 %v1836, 4294901760
        %1838 = vmatmul.mubr.f32.gmra.mrb[0].mxu0 %v1837
        %v1839 = vpop.f32.mrb[0].mxu0
        %v1840 = vadd.f32 %v1710, %v1839
        %v1841 = vpop.f32.mrb[0].mxu0
        %1842 = vmatprep.mubr.f32.mxu0 0.0
        %v1843 = vand.u32 %v1315, 4294901760
        %v1844 = vsub.f32 %v1315, %v1843
        %v1845 = vand.u32 %v1844, 4294901760
        %1846 = vmatmul.mubr.f32.gmra.mrb[0].mxu0 %v1845
        %v1847 = vpop.f32.mrb[0].mxu0
        %v1848 = vadd.f32 %v1717, %v1847
        %v1849 = vpop.f32.mrb[0].mxu0
        %1850 = vmatprep.mubr.f32.mxu0 0.0
        %v1851 = vand.u32 %v1318, 4294901760
        %v1852 = vsub.f32 %v1318, %v1851
        %v1853 = vand.u32 %v1852, 4294901760
        %1854 = vmatmul.mubr.f32.gmra.mrb[0].mxu0 %v1853
        %v1855 = vpop.f32.mrb[0].mxu0
        %v1856 = vadd.f32 %v1724, %v1855
        %v1857 = vpop.f32.mrb[0].mxu0
        %1858 = vmatprep.mubr.f32.mxu0 0.0
        %v1859 = vand.u32 %v1321, 4294901760
        %v1860 = vsub.f32 %v1321, %v1859
        %v1861 = vand.u32 %v1860, 4294901760
        %1862 = vmatmul.mubr.f32.gmra.mrb[0].mxu0 %v1861
        %v1863 = vpop.f32.mrb[0].mxu0
        %v1864 = vadd.f32 %v1731, %v1863
        %v1865 = vpop.f32.mrb[0].mxu0
        %1866 = vdwg.mxu0
        %1867 = vmatprep.subr.mxu0 0.0
        %v1868 = vand.u32 %v355, 4294901760
        %v1869 = vsub.f32 %v355, %v1868
        %v1870 = vand.u32 %v1869, 4294901760
        %1871 = vmatpush1.msra.mxu0 %v1870
        %1872 = vmatprep.subr.mxu0 0.0
        %v1873 = vand.u32 %v356, 4294901760
        %v1874 = vsub.f32 %v356, %v1873
        %v1875 = vand.u32 %v1874, 4294901760
        %1876 = vmatpush1.msra.mxu0 %v1875
        %1877 = vmatprep.subr.mxu0 0.0
        %v1878 = vand.u32 %v357, 4294901760
        %v1879 = vsub.f32 %v357, %v1878
        %v1880 = vand.u32 %v1879, 4294901760
        %1881 = vmatpush1.msra.mxu0 %v1880
        %1882 = vmatprep.subr.mxu0 0.0
        %v1883 = vand.u32 %v358, 4294901760
        %v1884 = vsub.f32 %v358, %v1883
        %v1885 = vand.u32 %v1884, 4294901760
        %1886 = vmatpush1.msra.mxu0 %v1885
        %1887 = vmatprep.subr.mxu0 0.0
        %1888 = vmatpush1.msra.mxu0 0.0
        %1889 = vmatprep.subr.mxu0 0.0
        %1890 = vmatpush1.msra.mxu0 0.0
        %1891 = vmatprep.subr.mxu0 0.0
        %1892 = vmatpush1.msra.mxu0 0.0
        %1893 = vmatprep.subr.mxu0 0.0
        %1894 = vmatpush1.msra.mxu0 0.0
        %1895 = vmatprep.subr.mxu0 0.0
        %1896 = vmatpush1.msra.mxu0 0.0
        %1897 = vmatprep.subr.mxu0 0.0
        %1898 = vmatpush1.msra.mxu0 0.0
        %1899 = vmatprep.subr.mxu0 0.0
        %1900 = vmatpush1.msra.mxu0 0.0
        %1901 = vmatprep.subr.mxu0 0.0
        %1902 = vmatpush1.msra.mxu0 0.0
        %1903 = vmatprep.subr.mxu0 0.0
        %1904 = vmatpush1.msra.mxu0 0.0
        %1905 = vmatprep.subr.mxu0 0.0
        %1906 = vmatpush1.msra.mxu0 0.0
        %1907 = vmatprep.subr.mxu0 0.0
        %1908 = vmatpush1.msra.mxu0 0.0
        %1909 = vmatprep.subr.mxu0 0.0
        %1910 = vmatpush1.msra.mxu0 0.0
        %1911 = vmatprep.subr.mxu0 0.0
        %1912 = vmatpush1.msra.mxu0 0.0
        %1913 = vmatprep.subr.mxu0 0.0
        %1914 = vmatpush1.msra.mxu0 0.0
        %1915 = vmatprep.subr.mxu0 0.0
        %1916 = vmatpush1.msra.mxu0 0.0
        %1917 = vmatprep.subr.mxu0 0.0
        %1918 = vmatpush1.msra.mxu0 0.0
        %1919 = vmatprep.subr.mxu0 0.0
        %1920 = vmatpush1.msra.mxu0 0.0
        %1921 = vmatprep.subr.mxu0 0.0
        %1922 = vmatpush1.msra.mxu0 0.0
        %1923 = vmatprep.subr.mxu0 0.0
        %1924 = vmatpush1.msra.mxu0 0.0
        %1925 = vmatprep.subr.mxu0 0.0
        %1926 = vmatpush1.msra.mxu0 0.0
        %1927 = vmatprep.subr.mxu0 0.0
        %1928 = vmatpush1.msra.mxu0 0.0
        %1929 = vmatprep.subr.mxu0 0.0
        %1930 = vmatpush1.msra.mxu0 0.0
        %1931 = vmatprep.subr.mxu0 0.0
        %1932 = vmatpush1.msra.mxu0 0.0
        %1933 = vmatprep.subr.mxu0 0.0
        %1934 = vmatpush1.msra.mxu0 0.0
        %1935 = vmatprep.subr.mxu0 0.0
        %1936 = vmatpush1.msra.mxu0 0.0
        %1937 = vmatprep.subr.mxu0 0.0
        %1938 = vmatpush1.msra.mxu0 0.0
        %1939 = vmatprep.subr.mxu0 0.0
        %1940 = vmatpush1.msra.mxu0 0.0
        %1941 = vmatprep.subr.mxu0 0.0
        %1942 = vmatpush1.msra.mxu0 0.0
        %1943 = vmatprep.mubr.f32.mxu0 0.0
        %v1944 = vand.u32 %v1300, 4294901760
        %1945 = vmatmul.mubr.f32.gmra.mrb[0].mxu0 %v1944
        %v1946 = vpop.f32.mrb[0].mxu0
        %v1947 = vadd.f32 %v1808, %v1946
        %v1948 = vpop.f32.mrb[0].mxu0
        %1949 = vmatprep.mubr.f32.mxu0 0.0
        %v1950 = vand.u32 %v1303, 4294901760
        %1951 = vmatmul.mubr.f32.gmra.mrb[0].mxu0 %v1950
        %v1952 = vpop.f32.mrb[0].mxu0
        %v1953 = vadd.f32 %v1816, %v1952
        %v1954 = vpop.f32.mrb[0].mxu0
        %1955 = vmatprep.mubr.f32.mxu0 0.0
        %v1956 = vand.u32 %v1306, 4294901760
        %1957 = vmatmul.mubr.f32.gmra.mrb[0].mxu0 %v1956
        %v1958 = vpop.f32.mrb[0].mxu0
        %v1959 = vadd.f32 %v1824, %v1958
        %v1960 = vpop.f32.mrb[0].mxu0
        %1961 = vmatprep.mubr.f32.mxu0 0.0
        %v1962 = vand.u32 %v1309, 4294901760
        %1963 = vmatmul.mubr.f32.gmra.mrb[0].mxu0 %v1962
        %v1964 = vpop.f32.mrb[0].mxu0
        %v1965 = vadd.f32 %v1832, %v1964
        %v1966 = vpop.f32.mrb[0].mxu0
        %1967 = vmatprep.mubr.f32.mxu0 0.0
        %v1968 = vand.u32 %v1312, 4294901760
        %1969 = vmatmul.mubr.f32.gmra.mrb[0].mxu0 %v1968
        %v1970 = vpop.f32.mrb[0].mxu0
        %v1971 = vadd.f32 %v1840, %v1970
        %v1972 = vpop.f32.mrb[0].mxu0
        %1973 = vmatprep.mubr.f32.mxu0 0.0
        %v1974 = vand.u32 %v1315, 4294901760
        %1975 = vmatmul.mubr.f32.gmra.mrb[0].mxu0 %v1974
        %v1976 = vpop.f32.mrb[0].mxu0
        %v1977 = vadd.f32 %v1848, %v1976
        %v1978 = vpop.f32.mrb[0].mxu0
        %1979 = vmatprep.mubr.f32.mxu0 0.0
        %v1980 = vand.u32 %v1318, 4294901760
        %1981 = vmatmul.mubr.f32.gmra.mrb[0].mxu0 %v1980
        %v1982 = vpop.f32.mrb[0].mxu0
        %v1983 = vadd.f32 %v1856, %v1982
        %v1984 = vpop.f32.mrb[0].mxu0
        %1985 = vmatprep.mubr.f32.mxu0 0.0
        %v1986 = vand.u32 %v1321, 4294901760
        %1987 = vmatmul.mubr.f32.gmra.mrb[0].mxu0 %v1986
        %v1988 = vpop.f32.mrb[0].mxu0
        %v1989 = vadd.f32 %v1864, %v1988
        %v1990 = vpop.f32.mrb[0].mxu0
        %1991 = vdwg.mxu0
        %1992 = vmatprep.subr.mxu0 0.0
        %v1993 = vand.u32 %v355, 4294901760
        %1994 = vmatpush1.msra.mxu0 %v1993
        %1995 = vmatprep.subr.mxu0 0.0
        %v1996 = vand.u32 %v356, 4294901760
        %1997 = vmatpush1.msra.mxu0 %v1996
        %1998 = vmatprep.subr.mxu0 0.0
        %v1999 = vand.u32 %v357, 4294901760
        %2000 = vmatpush1.msra.mxu0 %v1999
        %2001 = vmatprep.subr.mxu0 0.0
        %v2002 = vand.u32 %v358, 4294901760
        %2003 = vmatpush1.msra.mxu0 %v2002
        %2004 = vmatprep.subr.mxu0 0.0
        %2005 = vmatpush1.msra.mxu0 0.0
        %2006 = vmatprep.subr.mxu0 0.0
        %2007 = vmatpush1.msra.mxu0 0.0
        %2008 = vmatprep.subr.mxu0 0.0
        %2009 = vmatpush1.msra.mxu0 0.0
        %2010 = vmatprep.subr.mxu0 0.0
        %2011 = vmatpush1.msra.mxu0 0.0
        %2012 = vmatprep.subr.mxu0 0.0
        %2013 = vmatpush1.msra.mxu0 0.0
        %2014 = vmatprep.subr.mxu0 0.0
        %2015 = vmatpush1.msra.mxu0 0.0
        %2016 = vmatprep.subr.mxu0 0.0
        %2017 = vmatpush1.msra.mxu0 0.0
        %2018 = vmatprep.subr.mxu0 0.0
        %2019 = vmatpush1.msra.mxu0 0.0
        %2020 = vmatprep.subr.mxu0 0.0
        %2021 = vmatpush1.msra.mxu0 0.0
        %2022 = vmatprep.subr.mxu0 0.0
        %2023 = vmatpush1.msra.mxu0 0.0
        %2024 = vmatprep.subr.mxu0 0.0
        %2025 = vmatpush1.msra.mxu0 0.0
        %2026 = vmatprep.subr.mxu0 0.0
        %2027 = vmatpush1.msra.mxu0 0.0
        %2028 = vmatprep.subr.mxu0 0.0
        %2029 = vmatpush1.msra.mxu0 0.0
        %2030 = vmatprep.subr.mxu0 0.0
        %2031 = vmatpush1.msra.mxu0 0.0
        %2032 = vmatprep.subr.mxu0 0.0
        %2033 = vmatpush1.msra.mxu0 0.0
        %2034 = vmatprep.subr.mxu0 0.0
        %2035 = vmatpush1.msra.mxu0 0.0
        %2036 = vmatprep.subr.mxu0 0.0
        %2037 = vmatpush1.msra.mxu0 0.0
        %2038 = vmatprep.subr.mxu0 0.0
        %2039 = vmatpush1.msra.mxu0 0.0
        %2040 = vmatprep.subr.mxu0 0.0
        %2041 = vmatpush1.msra.mxu0 0.0
        %2042 = vmatprep.subr.mxu0 0.0
        %2043 = vmatpush1.msra.mxu0 0.0
        %2044 = vmatprep.subr.mxu0 0.0
        %2045 = vmatpush1.msra.mxu0 0.0
        %2046 = vmatprep.subr.mxu0 0.0
        %2047 = vmatpush1.msra.mxu0 0.0
        %2048 = vmatprep.subr.mxu0 0.0
        %2049 = vmatpush1.msra.mxu0 0.0
        %2050 = vmatprep.subr.mxu0 0.0
        %2051 = vmatpush1.msra.mxu0 0.0
        %2052 = vmatprep.subr.mxu0 0.0
        %2053 = vmatpush1.msra.mxu0 0.0
        %2054 = vmatprep.subr.mxu0 0.0
        %2055 = vmatpush1.msra.mxu0 0.0
        %2056 = vmatprep.subr.mxu0 0.0
        %2057 = vmatpush1.msra.mxu0 0.0
        %2058 = vmatprep.subr.mxu0 0.0
        %2059 = vmatpush1.msra.mxu0 0.0
        %2060 = vmatprep.mubr.f32.mxu0 0.0
        %v2061 = vand.u32 %v1300, 4294901760
        %2062 = vmatmul.mubr.f32.gmra.mrb[0].mxu0 %v2061
        %v2063 = vpop.f32.mrb[0].mxu0
        %v2064 = vadd.f32 %v1947, %v2063
        %v2065 = vpop.f32.mrb[0].mxu0
        %2066 = vmatprep.mubr.f32.mxu0 0.0
        %v2067 = vand.u32 %v1303, 4294901760
        %2068 = vmatmul.mubr.f32.gmra.mrb[0].mxu0 %v2067
        %v2069 = vpop.f32.mrb[0].mxu0
        %v2070 = vadd.f32 %v1953, %v2069
        %v2071 = vpop.f32.mrb[0].mxu0
        %2072 = vmatprep.mubr.f32.mxu0 0.0
        %v2073 = vand.u32 %v1306, 4294901760
        %2074 = vmatmul.mubr.f32.gmra.mrb[0].mxu0 %v2073
        %v2075 = vpop.f32.mrb[0].mxu0
        %v2076 = vadd.f32 %v1959, %v2075
        %v2077 = vpop.f32.mrb[0].mxu0
        %2078 = vmatprep.mubr.f32.mxu0 0.0
        %v2079 = vand.u32 %v1309, 4294901760
        %2080 = vmatmul.mubr.f32.gmra.mrb[0].mxu0 %v2079
        %v2081 = vpop.f32.mrb[0].mxu0
        %v2082 = vadd.f32 %v1965, %v2081
        %v2083 = vpop.f32.mrb[0].mxu0
        %2084 = vmatprep.mubr.f32.mxu0 0.0
        %v2085 = vand.u32 %v1312, 4294901760
        %2086 = vmatmul.mubr.f32.gmra.mrb[0].mxu0 %v2085
        %v2087 = vpop.f32.mrb[0].mxu0
        %v2088 = vadd.f32 %v1971, %v2087
        %v2089 = vpop.f32.mrb[0].mxu0
        %2090 = vmatprep.mubr.f32.mxu0 0.0
        %v2091 = vand.u32 %v1315, 4294901760
        %2092 = vmatmul.mubr.f32.gmra.mrb[0].mxu0 %v2091
        %v2093 = vpop.f32.mrb[0].mxu0
        %v2094 = vadd.f32 %v1977, %v2093
        %v2095 = vpop.f32.mrb[0].mxu0
        %2096 = vmatprep.mubr.f32.mxu0 0.0
        %v2097 = vand.u32 %v1318, 4294901760
        %2098 = vmatmul.mubr.f32.gmra.mrb[0].mxu0 %v2097
        %v2099 = vpop.f32.mrb[0].mxu0
        %v2100 = vadd.f32 %v1983, %v2099
        %v2101 = vpop.f32.mrb[0].mxu0
        %2102 = vmatprep.mubr.f32.mxu0 0.0
        %v2103 = vand.u32 %v1321, 4294901760
        %2104 = vmatmul.mubr.f32.gmra.mrb[0].mxu0 %v2103
        %v2105 = vpop.f32.mrb[0].mxu0
        %v2106 = vadd.f32 %v1989, %v2105
        %v2107 = vpop.f32.mrb[0].mxu0
        %2108 = vdwg.mxu0
        %vm2109 = vcmask 31744
        %2110 = vst.msk [vmem:[%s348] sm:$0xff] %vm2109, %v2064
        %2111 = vst.msk [vmem:[%s348 + $0x8] sm:$0xff] %vm2109, %v2070
        %2112 = vst.msk [vmem:[%s348 + $0x10] sm:$0xff] %vm2109, %v2076
        %2113 = vst.msk [vmem:[%s348 + $0x18] sm:$0xff] %vm2109, %v2082
        %2114 = vst.msk [vmem:[%s348 + $0x20] sm:$0xff] %vm2109, %v2088
        %2115 = vst.msk [vmem:[%s348 + $0x28] sm:$0xff] %vm2109, %v2094
        %2116 = vst.msk [vmem:[%s348 + $0x30] sm:$0xff] %vm2109, %v2100
        %2117 = vst.msk [vmem:[%s348 + $0x38] sm:$0xff] %vm2109, %v2106
        %s2118 = smul.u32 8, %s29
        %p2119 = scmp.lt.s32.totalorder %s28, 1
        %s2120 = scalar_select %p2119, %s28, 1
        %p2121 = scmp.lt.s32.totalorder %s2118, 7
        %s2122 = scalar_select %p2121, %s2118, 7
        %p2123 = scmp.lt.s32.totalorder %s30, 0
        %s2124 = scalar_select %p2123, %s30, 0
        %s2125 = sadd.s32 %s2124, %s2122
        %s2126 = smul.addr %s2120, 8
        %s2127 = sadd.s32 %s2125, %s2126
        %s2128 = smul.addr %s2127, 8
        %s2129 = scalar_lea.vmem %s6, %s2128
        // Predicated region
        $region53: #{tpu_custom_call.1} parent=43 // pred_check
          %p2130 = pneg %p204
        $region54: #{tpu_custom_call.1} parent=43 // pred_check_branch
          %2132 = sbr.rel (%p2130) target = $region56
        $region55: #{tpu_custom_call.1} parent=43 // pred_region
          %s2133 = smul.u32 8, %s29
        $region56: #{tpu_custom_call.1} parent=43 // pred_fallthru
          _
      $region44: #{tpu_custom_call.1} parent=5 // pred_fallthru
        _
      %p2134 = scmp.le.s32.totalorder 2, %s18
      // Predicated region
      $region57: #{tpu_custom_call.1} parent=5 // pred_check
        %p2135 = pneg %p2134
      $region58: #{tpu_custom_call.1} parent=5 // pred_check_branch
        %2137 = sbr.rel (%p2135) target = $region60
      $region59: #{tpu_custom_call.1} parent=5 // pred_region
        %s2138 = ssub.s32 %s18, 2
        // Predicated region
        $region61: #{tpu_custom_call.1} parent=59 // pred_check
          %p2139 = pneg %p210
        $region62: #{tpu_custom_call.1} parent=59 // pred_check_branch
          %2141 = sbr.rel (%p2139) target = $region64
        $region63: #{tpu_custom_call.1} parent=59 // pred_region
          %s2142 = smul.u32 8, %s32
          %p2143 = scmp.lt.s32.totalorder %s31, 1
          %s2144 = scalar_select %p2143, %s31, 1
          %p2145 = scmp.lt.s32.totalorder %s2142, 7
          %s2146 = scalar_select %p2145, %s2142, 7
          %p2147 = scmp.lt.s32.totalorder %s33, 0
          %s2148 = scalar_select %p2147, %s33, 0
          %s2149 = sadd.s32 %s2148, %s2146
          %s2150 = smul.addr %s2144, 8
          %s2151 = sadd.s32 %s2149, %s2150
          %s2152 = smul.addr %s2151, 8
          %s2153 = scalar_lea.vmem %s6, %s2152
        $region64: #{tpu_custom_call.1} parent=59 // pred_fallthru
          _
      $region60: #{tpu_custom_call.1} parent=5 // pred_fallthru
        _
    $region6: #{tpu_custom_call.1} parent=1 // loop_footer
      %s22 = sadd.s32 1, %s18
    $region7: #{tpu_custom_call.1} parent=1 // loop_footer_branch
      %17 = sbr.rel target = $region3
    $region8: #{tpu_custom_call.1} parent=1 // loop_exit
      _
    %2154 = vsyncpa [#allocation3], 1
    %s2155 = scalar_lea.sflag [#allocation3], 1
    %2156 = vsyncpa %s2155, 1
    %2157 = vsyncpa [#allocation5], 1
    %s2158 = scalar_lea.sflag [#allocation5], 1
    %2159 = vsyncpa %s2158, 1

</llo_original>
